<compile_context>
chip_gen: v6e
topology: v6e:2x2x1
jax: 0.10.0
libtpu: 0.0.40
codegen_flags: <defaults>
</compile_context>

<pallas_src>
import math
from functools import partial

import jax
import jax.numpy as jnp
from jax import lax
from jax.experimental import pallas as pl
from jax.experimental.pallas import tpu as pltpu


# ------------------------------ fused kernel --------------------------------


def _fused_forward_kernel(
    num_graphs, matmul_dtype,
    # data
    x1_ref, x2_ref, b1_ref, b2_ref,
    # ds1 (proj folded into phi's first layer)
    wa1_ref, ba1_ref, wa2_ref, ba2_ref, wr1_ref, br1_ref, wr2_ref, br2_ref,
    # ds2 (proj folded into the x-half of phi layer 1; concat == split matmul)
    wc1x_ref, wc1u_ref, bc1_ref, wc2_ref, bc2_ref,
    wd1_ref, bd1_ref, wd2_ref, bd2_ref,
    # final mlp (last layer lane-padded to a multiple of 128)
    wm1_ref, bm1_ref, wm2_ref, bm2_ref,
    # output
    o_ref,
    # scratch
    agg_sc, r_sc,
):
    phase = pl.program_id(0)       # 0: ds1 pass over graph-1 nodes, 1: ds2 pass
    tile = pl.program_id(1)        # node tile
    last = tile == pl.num_programs(1) - 1
    f32 = jnp.float32

    # reset the per-graph accumulator at the start of each phase
    @pl.when(tile == 0)
    def _():
        agg_sc[...] = jnp.zeros_like(agg_sc)

    ids1 = b1_ref[...]             # (1, TN) lane-dense int32 graph ids (graph 1)
    tn = ids1.shape[1]
    # (num_graphs, TN) one-hot built in-register (no (B, N) matrix in HBM).
    # This orientation makes the segment-sum dot MXU-native (contract TN = K).
    # NOTE: ids >= num_graphs are silently dropped, matching segment_sum.
    oh1 = (lax.broadcasted_iota(jnp.int32, (num_graphs, tn), 0) == ids1).astype(f32)

    @pl.when(phase == 0)
    def _():
        # phi_1(proj(x1)) with proj folded into the first layer; matmul
        # operands in matmul_dtype (bf16 by default), f32 accumulate.
        x = x1_ref[...]
        h = jnp.dot(x, wa1_ref[...], preferred_element_type=f32) + ba1_ref[...]
        h = jnp.maximum(h, 0.0).astype(matmul_dtype)
        phi = jnp.dot(h, wa2_ref[...], preferred_element_type=f32) + ba2_ref[...]
        # segment sum by graph id: (B, TN) @ (TN, H) on the MXU
        agg_sc[...] += jnp.dot(oh1.astype(matmul_dtype), phi.astype(matmul_dtype),
                               preferred_element_type=f32)

    @pl.when(jnp.logical_and(phase == 0, last))
    def _():
        # rho_1 -> u1 (tiny (B, H) work, kept f32); then pre-fold the u-half of
        # ds2's first phi layer: r = u1 @ W11_u, handed to phase 1 via r_sc.
        h = jnp.maximum(
            jnp.dot(agg_sc[...], wr1_ref[...], preferred_element_type=f32)
            + br1_ref[...], 0.0)
        u1 = jnp.dot(h, wr2_ref[...], preferred_element_type=f32) + br2_ref[...]
        r_sc[...] = jnp.dot(u1, wc1u_ref[...], preferred_element_type=f32)

    @pl.when(phase == 1)
    def _():
        ids2 = b2_ref[...]
        oh2 = (lax.broadcasted_iota(jnp.int32, (num_graphs, tn), 0) == ids2).astype(f32)
        x = x2_ref[...]
        # phi_2(cat([proj(x2), u1[batch1]])) without materializing the concat:
        #   proj(x2) @ W11_x  +  (u1 @ W11_u)[batch1]
        # The gather contracts the tiny B dim (only this small dot stays in the
        # transposed orientation, per the perf review).
        gat = lax.dot_general(oh1, r_sc[...], (((0,), (0,)), ((), ())),
                              preferred_element_type=f32)
        hx = (jnp.dot(x, wc1x_ref[...], preferred_element_type=f32)
              + gat + bc1_ref[...])
        hx = jnp.maximum(hx, 0.0).astype(matmul_dtype)
        phi = jnp.dot(hx, wc2_ref[...], preferred_element_type=f32) + bc2_ref[...]
        agg_sc[...] += jnp.dot(oh2.astype(matmul_dtype), phi.astype(matmul_dtype),
                               preferred_element_type=f32)

    @pl.when(jnp.logical_and(phase == 1, last))
    def _():
        # rho_2 -> u2, then the final mlp (all tiny, f32); lane-dense store.
        h = jnp.maximum(
            jnp.dot(agg_sc[...], wd1_ref[...], preferred_element_type=f32)
            + bd1_ref[...], 0.0)
        u2 = jnp.dot(h, wd2_ref[...], preferred_element_type=f32) + bd2_ref[...]
        h2 = jnp.maximum(
            jnp.dot(u2, wm1_ref[...], preferred_element_type=f32)
            + bm1_ref[...], 0.0)
        o_ref[...] = jnp.dot(h2, wm2_ref[...], preferred_element_type=f32) + bm2_ref[...]


# ------------------------- host-side weight fusion --------------------------


def _fuse_params(params, f_out_pad, matmul_dtype):
    """Exact algebraic folding of proj into the phi first layers + padding.

    Node-path weight matrices (wa1, wa2, wc1x, wc2) are cast to matmul_dtype
    host-side (halves their HBM/VMEM bytes in the bf16 path); everything on
    the tiny per-graph path stays f32.
    """
    pw, pb = params["proj_w"], params["proj_b"]
    ds1, ds2, mlp = params["ds1"], params["ds2"], params["mlp"]
    h = pw.shape[1]
    row = lambda b: b.reshape(1, -1)

    # ds1: phi layer-1 fused with proj (fold in f32, then cast)
    wa1 = (pw @ ds1["w11"]).astype(matmul_dtype)
    ba1 = pb @ ds1["w11"] + ds1["b11"]
    wa2 = ds1["w12"].astype(matmul_dtype)

    # ds2: split phi layer-1 over the concat [proj(x2), u1[batch1]]
    w11x, w11u = ds2["w11"][:h], ds2["w11"][h:]
    wc1x = (pw @ w11x).astype(matmul_dtype)
    bc1 = pb @ w11x + ds2["b11"]
    wc2 = ds2["w12"].astype(matmul_dtype)

    # lane-pad the final layer so the kernel's HBM output is 128-wide
    wm2 = jnp.zeros((mlp["w2"].shape[0], f_out_pad), jnp.float32)
    wm2 = wm2.at[:, : mlp["w2"].shape[1]].set(mlp["w2"])
    bm2 = jnp.zeros((f_out_pad,), jnp.float32).at[: mlp["b2"].shape[0]].set(mlp["b2"])

    return [
        wa1, row(ba1), wa2, row(ds1["b12"]),
        ds1["w21"], row(ds1["b21"]), ds1["w22"], row(ds1["b22"]),
        wc1x, w11u, row(bc1), wc2, row(ds2["b12"]),
        ds2["w21"], row(ds2["b21"]), ds2["w22"], row(ds2["b22"]),
        mlp["w1"], row(mlp["b1"]), wm2, row(bm2),
    ]


def _padded_vmem_bytes(shape, dtype):
    """Rough VMEM footprint of one block, rounded up to (8, 128) tiles."""
    shape = tuple(int(d) for d in shape)
    if len(shape) < 2:
        shape = (1,) * (2 - len(shape)) + shape
    *lead, s, l = shape
    s = -(-s // 8) * 8
    l = -(-l // 128) * 128
    n = 1
    for d in lead:
        n *= d
    return n * s * l * jnp.dtype(dtype).itemsize


# ------------------------------ forward pass ---------------------------------


def forward(params, graph1, graph2, num_graphs, *, node_tile=None,
            matmul_dtype=jnp.bfloat16):
    x1, _e1, _u1, batch1 = graph1
    x2, _e2, _u2, batch2 = graph2
    # NOTE: the original forward also computes proj(e*) / proj(u*) and discards
    # them; those dead projections are dropped (no observable effect).

    n, f_x = x1.shape
    assert x2.shape == (n, f_x), "cat([x2, u1[batch1]], 1) requires N1 == N2"

    if node_tile is None:
        # Small graphs: one tile per phase (grid=(2,1)) -> zero per-step
        # pipeline overhead.  Large graphs: 512-node tiles (multiple of 256 for
        # v6e/v7x MXU rows; still a multiple of 128 for v5e / lane-dense ids).
        node_tile = n if n <= 1024 else 512
    assert n % node_tile == 0, "TODO(synk): pad ragged node counts to the tile"
    assert node_tile == n or node_tile % 128 == 0
    n_tiles = n // node_tile

    agg_dim = params["ds1"]["w12"].shape[1]         # phi output dim (== h)
    assert params["ds2"]["w12"].shape[1] == agg_dim
    r_dim = params["ds2"]["w11"].shape[1]           # ds2 phi hidden dim
    hid1 = params["ds1"]["w11"].shape[1]
    f_out = params["mlp"]["w2"].shape[1]
    f_out_pad = ((f_out + 127) // 128) * 128

    weights = _fuse_params(params, f_out_pad, matmul_dtype)

    x1c = x1.astype(matmul_dtype)                    # bf16 node path (default)
    x2c = x2.astype(matmul_dtype)
    b1 = batch1.astype(jnp.int32).reshape(1, n)      # lane-dense id rows
    b2 = batch2.astype(jnp.int32).reshape(1, n)

    data_specs = [
        # x1 is only needed in phase 0, x2 only in phase 1: clamp the off-phase
        # block index to a constant so Pallas skips re-DMA of the unused input.
        pl.BlockSpec((node_tile, f_x), lambda p, t: ((1 - p) * t, 0)),
        pl.BlockSpec((node_tile, f_x), lambda p, t: (p * t, 0)),
        pl.BlockSpec((1, node_tile), lambda p, t: (0, t)),        # b1: both phases
        pl.BlockSpec((1, node_tile), lambda p, t: (0, p * t)),    # b2: phase 1 only
    ]
    weight_specs = [pl.BlockSpec(w.shape, lambda p, t: (0, 0)) for w in weights]

    # Advisory cost estimate (per-node matmuls dominate).
    flops = int(
        2 * n * (f_x * hid1 + hid1 * agg_dim)            # phi1
        + 2 * n * (f_x * r_dim + r_dim * agg_dim)        # phi2 (x-half)
        + 2 * num_graphs * n * (2 * agg_dim + r_dim)     # seg-sums + u1 gather
    )
    bytes_accessed = int(
        x1c.size * x1c.dtype.itemsize + x2c.size * x2c.dtype.itemsize
        + b1.size * 4 + b2.size * 4
        + sum(w.size * w.dtype.itemsize for w in weights)
        + num_graphs * f_out_pad * 4
    )

    # VMEM budget: 2 pipeline buffers per input block + weights + scratch +
    # output, with 2x headroom, clamped to v7x's 64 MiB physical VMEM.
    in_blocks = [((node_tile, f_x), matmul_dtype), ((node_tile, f_x), matmul_dtype),
                 ((1, node_tile), jnp.int32), ((1, node_tile), jnp.int32)]
    est = 2 * sum(_padded_vmem_bytes(s, d) for s, d in in_blocks)
    est += 2 * sum(_padded_vmem_bytes(w.shape, w.dtype) for w in weights)
    est += 2 * _padded_vmem_bytes((num_graphs, f_out_pad), jnp.float32)
    est += _padded_vmem_bytes((num_graphs, agg_dim), jnp.float32)
    est += _padded_vmem_bytes((num_graphs, r_dim), jnp.float32)
    vmem_limit = int(min(max(2 * est, 16 * 2**20), 64 * 2**20))

    out = pl.pallas_call(
        partial(_fused_forward_kernel, num_graphs, matmul_dtype),
        grid_spec=pltpu.PrefetchScalarGridSpec(
            num_scalar_prefetch=0,
            grid=(2, n_tiles),                 # (phase, node tile)
            in_specs=data_specs + weight_specs,
            out_specs=pl.BlockSpec((num_graphs, f_out_pad), lambda p, t: (0, 0)),
            scratch_shapes=[
                pltpu.VMEM((num_graphs, agg_dim), jnp.float32),  # segment-sum acc
                pltpu.VMEM((num_graphs, r_dim), jnp.float32),    # r = u1 @ W11_u
            ],
        ),
        out_shape=jax.ShapeDtypeStruct((num_graphs, f_out_pad), jnp.float32),
        compiler_params=pltpu.CompilerParams(
            # Both axes carry sequential state (accumulator; phase-0 -> phase-1
            # r_sc handoff) -- marking either "parallel" would be incorrect.
            dimension_semantics=("arbitrary", "arbitrary"),
            vmem_limit_bytes=vmem_limit,
        ),
        cost_estimate=pl.CostEstimate(
            flops=flops, transcendentals=0, bytes_accessed=bytes_accessed),
    )(x1c, x2c, b1, b2, *weights)

    return [out[:, :f_out]]


# ------------------------------ parameter init -------------------------------


def _init_linear(key, fin, fout):
    kw, kb = jax.random.split(key)
    s = 1.0 / math.sqrt(fin)
    w = jax.random.uniform(kw, (fin, fout), jnp.float32, minval=-s, maxval=s)
    b = jax.random.uniform(kb, (fout,), jnp.float32, minval=-s, maxval=s)
    return w, b


def _init_mlp(key, fin, hid, fout):
    k1, k2 = jax.random.split(key)
    w1, b1 = _init_linear(k1, fin, hid)
    w2, b2 = _init_linear(k2, hid, fout)
    return {"w1": w1, "b1": b1, "w2": w2, "b2": b2}


def _init_deepset(key, fin, hid, h_agg, fout):
    k1, k2 = jax.random.split(key)
    m1 = _init_mlp(k1, fin, hid, h_agg)   # phi
    m2 = _init_mlp(k2, h_agg, hid, fout)  # rho
    return {
        "w11": m1["w1"], "b11": m1["b1"], "w12": m1["w2"], "b12": m1["b2"],
        "w21": m2["w1"], "b21": m2["b1"], "w22": m2["w2"], "b22": m2["b2"],
    }


def init_params(key, f_x, h, hid, f_out):
    kp, k1, k2, k3 = jax.random.split(key, 4)
    proj_w, proj_b = _init_linear(kp, f_x, h)
    return {
        "proj_w": proj_w,
        "proj_b": proj_b,
        "ds1": _init_deepset(k1, h, hid, h, h),       # DeepSet(h, h, h)
        "ds2": _init_deepset(k2, 2 * h, hid, h, h),   # DeepSet(2h, h, h)
        "mlp": _init_mlp(k3, h, hid, f_out),          # model_fn(h, f_out)
    }


# ------------------------- pure-JAX reference (unfused) -----------------------


def _mlp_ref(x, p):
    h = jnp.maximum(x @ p["w1"] + p["b1"], 0.0)
    return h @ p["w2"] + p["b2"]


def _deepset_ref(x, batch, p, num_graphs):
    h = jnp.maximum(x @ p["w11"] + p["b11"], 0.0)
    phi = h @ p["w12"] + p["b12"]
    agg = jax.ops.segment_sum(phi, batch, num_segments=num_graphs)
    h = jnp.maximum(agg @ p["w21"] + p["b21"], 0.0)
    return h @ p["w22"] + p["b22"]


def reference_forward(params, graph1, graph2, num_graphs):
    x1, _e1, _u1, b1 = graph1
    x2, _e2, _u2, b2 = graph2
    proj = lambda v: v @ params["proj_w"] + params["proj_b"]
    x1p, x2p = proj(x1), proj(x2)
    u1o = _deepset_ref(x1p, b1, params["ds1"], num_graphs)
    x2c = jnp.concatenate([x2p, u1o[b1]], axis=1)
    u2o = _deepset_ref(x2c, b2, params["ds2"], num_graphs)
    return [_mlp_ref(u2o, params["mlp"])]


# ----------------------------------- main -------------------------------------


if __name__ == "__main__":
    B = 2
    NODES_PER_GRAPH = 8
    N = B * NODES_PER_GRAPH
    E = 24
    F_X = 4
    H = 32
    HID = 32
    F_OUT = 16

    key = jax.random.PRNGKey(0)
    kparams, kx1, ke1, ku1, kx2, ke2, ku2 = jax.random.split(key, 7)

    params = init_params(kparams, F_X, H, HID, F_OUT)

    batch = jnp.repeat(jnp.arange(B, dtype=jnp.int32), NODES_PER_GRAPH)

    graph1 = (
        jax.random.normal(kx1, (N, F_X), jnp.float32),   # node features
        jax.random.normal(ke1, (E, F_X), jnp.float32),   # edge features (unused)
        jax.random.normal(ku1, (B, F_X), jnp.float32),   # globals (unused)
        batch,
    )
    graph2 = (
        jax.random.normal(kx2, (N, F_X), jnp.float32),
        jax.random.normal(ke2, (E, F_X), jnp.float32),
        jax.random.normal(ku2, (B, F_X), jnp.float32),
        batch,
    )

    ref = reference_forward(params, graph1, graph2, B)[0]

    # Exact-math path (fp32 MXU operands): tight tolerance.
    out_f32 = jax.block_until_ready(
        forward(params, graph1, graph2, B, matmul_dtype=jnp.float32)[0])
    assert out_f32.shape == (B, F_OUT), out_f32.shape
    assert out_f32.dtype == jnp.float32
    err32 = float(jnp.max(jnp.abs(out_f32 - ref)))
    assert bool(jnp.allclose(out_f32, ref, rtol=1e-3, atol=1e-3)), err32

    # Default fast path (bf16 MXU operands, f32 accumulate): loose tolerance.
    out_bf16 = jax.block_until_ready(forward(params, graph1, graph2, B)[0])
    assert out_bf16.shape == (B, F_OUT), out_bf16.shape
    assert out_bf16.dtype == jnp.float32
    errbf = float(jnp.max(jnp.abs(out_bf16 - ref)))
    assert bool(jnp.allclose(out_bf16, ref, rtol=5e-2, atol=5e-2)), errbf

    print("KERNEL_OK")
</pallas_src>

<mosaic_0001>
module attributes {stable_mosaic.version = 11 : i64} {
  func.func @_fused_forward_kernel(%arg0: i32, %arg1: i32, %arg2: memref<16x4xf32, #tpu.memory_space<vmem>>, %arg3: memref<16x4xf32, #tpu.memory_space<vmem>>, %arg4: memref<1x16xi32, #tpu.memory_space<vmem>>, %arg5: memref<1x16xi32, #tpu.memory_space<vmem>>, %arg6: memref<4x32xf32, #tpu.memory_space<vmem>>, %arg7: memref<1x32xf32, #tpu.memory_space<vmem>>, %arg8: memref<32x32xf32, #tpu.memory_space<vmem>>, %arg9: memref<1x32xf32, #tpu.memory_space<vmem>>, %arg10: memref<32x32xf32, #tpu.memory_space<vmem>>, %arg11: memref<1x32xf32, #tpu.memory_space<vmem>>, %arg12: memref<32x32xf32, #tpu.memory_space<vmem>>, %arg13: memref<1x32xf32, #tpu.memory_space<vmem>>, %arg14: memref<4x32xf32, #tpu.memory_space<vmem>>, %arg15: memref<32x32xf32, #tpu.memory_space<vmem>>, %arg16: memref<1x32xf32, #tpu.memory_space<vmem>>, %arg17: memref<32x32xf32, #tpu.memory_space<vmem>>, %arg18: memref<1x32xf32, #tpu.memory_space<vmem>>, %arg19: memref<32x32xf32, #tpu.memory_space<vmem>>, %arg20: memref<1x32xf32, #tpu.memory_space<vmem>>, %arg21: memref<32x32xf32, #tpu.memory_space<vmem>>, %arg22: memref<1x32xf32, #tpu.memory_space<vmem>>, %arg23: memref<32x32xf32, #tpu.memory_space<vmem>>, %arg24: memref<1x32xf32, #tpu.memory_space<vmem>>, %arg25: memref<32x128xf32, #tpu.memory_space<vmem>>, %arg26: memref<1x128xf32, #tpu.memory_space<vmem>>, %arg27: memref<2x128xf32, #tpu.memory_space<vmem>>, %arg28: memref<2x32xf32, #tpu.memory_space<vmem>>, %arg29: memref<2x32xf32, #tpu.memory_space<vmem>>) attributes {dimension_semantics = [#tpu.dimension_semantics<arbitrary>, #tpu.dimension_semantics<arbitrary>], iteration_bounds = array<i64: 2, 1>, scalar_prefetch = 0 : i64, scratch_operands = 2 : i64, tpu.core_type = #tpu.core_type<tc>, window_params = [{transform_indices = @transform_0, window_bounds = array<i64: 16, 4>}, {transform_indices = @transform_1, window_bounds = array<i64: 16, 4>}, {transform_indices = @transform_2, window_bounds = array<i64: 1, 16>}, {transform_indices = @transform_3, window_bounds = array<i64: 1, 16>}, {pipeline_mode = #tpu.pipeline_mode<synchronous>, transform_indices = @transform_4, window_bounds = array<i64: 4, 32>}, {pipeline_mode = #tpu.pipeline_mode<synchronous>, transform_indices = @transform_5, window_bounds = array<i64: 1, 32>}, {pipeline_mode = #tpu.pipeline_mode<synchronous>, transform_indices = @transform_6, window_bounds = array<i64: 32, 32>}, {pipeline_mode = #tpu.pipeline_mode<synchronous>, transform_indices = @transform_7, window_bounds = array<i64: 1, 32>}, {pipeline_mode = #tpu.pipeline_mode<synchronous>, transform_indices = @transform_8, window_bounds = array<i64: 32, 32>}, {pipeline_mode = #tpu.pipeline_mode<synchronous>, transform_indices = @transform_9, window_bounds = array<i64: 1, 32>}, {pipeline_mode = #tpu.pipeline_mode<synchronous>, transform_indices = @transform_10, window_bounds = array<i64: 32, 32>}, {pipeline_mode = #tpu.pipeline_mode<synchronous>, transform_indices = @transform_11, window_bounds = array<i64: 1, 32>}, {pipeline_mode = #tpu.pipeline_mode<synchronous>, transform_indices = @transform_12, window_bounds = array<i64: 4, 32>}, {pipeline_mode = #tpu.pipeline_mode<synchronous>, transform_indices = @transform_13, window_bounds = array<i64: 32, 32>}, {pipeline_mode = #tpu.pipeline_mode<synchronous>, transform_indices = @transform_14, window_bounds = array<i64: 1, 32>}, {pipeline_mode = #tpu.pipeline_mode<synchronous>, transform_indices = @transform_15, window_bounds = array<i64: 32, 32>}, {pipeline_mode = #tpu.pipeline_mode<synchronous>, transform_indices = @transform_16, window_bounds = array<i64: 1, 32>}, {pipeline_mode = #tpu.pipeline_mode<synchronous>, transform_indices = @transform_17, window_bounds = array<i64: 32, 32>}, {pipeline_mode = #tpu.pipeline_mode<synchronous>, transform_indices = @transform_18, window_bounds = array<i64: 1, 32>}, {pipeline_mode = #tpu.pipeline_mode<synchronous>, transform_indices = @transform_19, window_bounds = array<i64: 32, 32>}, {pipeline_mode = #tpu.pipeline_mode<synchronous>, transform_indices = @transform_20, window_bounds = array<i64: 1, 32>}, {pipeline_mode = #tpu.pipeline_mode<synchronous>, transform_indices = @transform_21, window_bounds = array<i64: 32, 32>}, {pipeline_mode = #tpu.pipeline_mode<synchronous>, transform_indices = @transform_22, window_bounds = array<i64: 1, 32>}, {pipeline_mode = #tpu.pipeline_mode<synchronous>, transform_indices = @transform_23, window_bounds = array<i64: 32, 128>}, {pipeline_mode = #tpu.pipeline_mode<synchronous>, transform_indices = @transform_24, window_bounds = array<i64: 1, 128>}, {pipeline_mode = #tpu.pipeline_mode<synchronous>, transform_indices = @transform_25, window_bounds = array<i64: 2, 128>}]} {
    %c0_i32 = arith.constant 0 : i32
    %0 = arith.cmpi eq, %arg1, %c0_i32 : i32
    %c0_i32_0 = arith.constant 0 : i32
    %1 = arith.cmpi eq, %arg1, %c0_i32_0 : i32
    %2 = arith.extui %1 : i1 to i32
    %c0_i32_1 = arith.constant 0 : i32
    %3 = arith.cmpi ne, %2, %c0_i32_1 : i32
    scf.if %3 {
      %cst = arith.constant 0.000000e+00 : f32
      %24 = vector.broadcast %cst : f32 to vector<2x32xf32>
      %c0_10 = arith.constant 0 : index
      %c0_11 = arith.constant 0 : index
      %25 = vector.load %arg28[%c0_10, %c0_11] : memref<2x32xf32, #tpu.memory_space<vmem>>, vector<2x32xf32>
      tpu.vector_store %arg28[%c0_10, %c0_11], %24 {strides = array<i32>} : memref<2x32xf32, #tpu.memory_space<vmem>>, vector<2x32xf32>,
    } else {
    }
    %c0 = arith.constant 0 : index
    %c0_2 = arith.constant 0 : index
    %4 = vector.load %arg4[%c0, %c0_2] : memref<1x16xi32, #tpu.memory_space<vmem>>, vector<1x16xi32>
    %5 = tpu.iota {dimensions = array<i32: 0>} : vector<2x16xi32>
    %6 = vector.broadcast %4 : vector<1x16xi32> to vector<2x16xi32>
    %7 = arith.cmpi eq, %5, %6 : vector<2x16xi32>
    %8 = arith.extui %7 : vector<2x16xi1> to vector<2x16xi32>
    %9 = arith.sitofp %8 : vector<2x16xi32> to vector<2x16xf32>
    %c0_i32_3 = arith.constant 0 : i32
    %10 = arith.cmpi eq, %arg0, %c0_i32_3 : i32
    %11 = arith.extui %10 : i1 to i32
    %c0_i32_4 = arith.constant 0 : i32
    %12 = arith.cmpi ne, %11, %c0_i32_4 : i32
    scf.if %12 {
      %c0_10 = arith.constant 0 : index
      %c0_11 = arith.constant 0 : index
      %24 = vector.load %arg2[%c0_10, %c0_11] : memref<16x4xf32, #tpu.memory_space<vmem>>, vector<16x4xf32>
      %c0_12 = arith.constant 0 : index
      %c0_13 = arith.constant 0 : index
      %25 = vector.load %arg6[%c0_12, %c0_13] : memref<4x32xf32, #tpu.memory_space<vmem>>, vector<4x32xf32>
      %cst = arith.constant dense<0.000000e+00> : vector<16x32xf32>
      %26 = tpu.matmul %24, %25, %cst {dimension_numbers = #tpu.dot_dimension_numbers<[1], [0], [0], [1], [0, 0, 1, 1], [], []>} : vector<16x4xf32>, vector<4x32xf32>, vector<16x32xf32> -> vector<16x32xf32>
      %c0_14 = arith.constant 0 : index
      %c0_15 = arith.constant 0 : index
      %27 = vector.load %arg7[%c0_14, %c0_15] : memref<1x32xf32, #tpu.memory_space<vmem>>, vector<1x32xf32>
      %28 = vector.broadcast %27 : vector<1x32xf32> to vector<16x32xf32>
      %29 = arith.addf %26, %28 : vector<16x32xf32>
      %cst_16 = arith.constant 0.000000e+00 : f32
      %30 = vector.broadcast %cst_16 : f32 to vector<16x32xf32>
      %31 = arith.maximumf %29, %30 : vector<16x32xf32>
      %c0_17 = arith.constant 0 : index
      %c0_18 = arith.constant 0 : index
      %32 = vector.load %arg8[%c0_17, %c0_18] : memref<32x32xf32, #tpu.memory_space<vmem>>, vector<32x32xf32>
      %cst_19 = arith.constant dense<0.000000e+00> : vector<16x32xf32>
      %33 = tpu.matmul %31, %32, %cst_19 {dimension_numbers = #tpu.dot_dimension_numbers<[1], [0], [0], [1], [0, 0, 1, 1], [], []>} : vector<16x32xf32>, vector<32x32xf32>, vector<16x32xf32> -> vector<16x32xf32>
      %c0_20 = arith.constant 0 : index
      %c0_21 = arith.constant 0 : index
      %34 = vector.load %arg9[%c0_20, %c0_21] : memref<1x32xf32, #tpu.memory_space<vmem>>, vector<1x32xf32>
      %35 = vector.broadcast %34 : vector<1x32xf32> to vector<16x32xf32>
      %36 = arith.addf %33, %35 : vector<16x32xf32>
      %c0_22 = arith.constant 0 : index
      %c0_23 = arith.constant 0 : index
      %37 = vector.load %arg28[%c0_22, %c0_23] : memref<2x32xf32, #tpu.memory_space<vmem>>, vector<2x32xf32>
      %cst_24 = arith.constant dense<0.000000e+00> : vector<2x32xf32>
      %38 = tpu.matmul %9, %36, %cst_24 {dimension_numbers = #tpu.dot_dimension_numbers<[1], [0], [0], [1], [0, 0, 1, 1], [], []>} : vector<2x16xf32>, vector<16x32xf32>, vector<2x32xf32> -> vector<2x32xf32>
      %39 = arith.addf %37, %38 : vector<2x32xf32>
      %c0_25 = arith.constant 0 : index
      %c0_26 = arith.constant 0 : index
      %40 = vector.load %arg28[%c0_25, %c0_26] : memref<2x32xf32, #tpu.memory_space<vmem>>, vector<2x32xf32>
      tpu.vector_store %arg28[%c0_25, %c0_26], %39 {strides = array<i32>} : memref<2x32xf32, #tpu.memory_space<vmem>>, vector<2x32xf32>,
    } else {
    }
    %c0_i32_5 = arith.constant 0 : i32
    %13 = arith.cmpi eq, %arg0, %c0_i32_5 : i32
    %14 = arith.andi %13, %0 : i1
    %15 = arith.extui %14 : i1 to i32
    %c0_i32_6 = arith.constant 0 : i32
    %16 = arith.cmpi ne, %15, %c0_i32_6 : i32
    scf.if %16 {
      %c0_10 = arith.constant 0 : index
      %c0_11 = arith.constant 0 : index
      %24 = vector.load %arg28[%c0_10, %c0_11] : memref<2x32xf32, #tpu.memory_space<vmem>>, vector<2x32xf32>
      %c0_12 = arith.constant 0 : index
      %c0_13 = arith.constant 0 : index
      %25 = vector.load %arg10[%c0_12, %c0_13] : memref<32x32xf32, #tpu.memory_space<vmem>>, vector<32x32xf32>
      %cst = arith.constant dense<0.000000e+00> : vector<2x32xf32>
      %26 = tpu.matmul %24, %25, %cst {dimension_numbers = #tpu.dot_dimension_numbers<[1], [0], [0], [1], [0, 0, 1, 1], [], []>} : vector<2x32xf32>, vector<32x32xf32>, vector<2x32xf32> -> vector<2x32xf32>
      %c0_14 = arith.constant 0 : index
      %c0_15 = arith.constant 0 : index
      %27 = vector.load %arg11[%c0_14, %c0_15] : memref<1x32xf32, #tpu.memory_space<vmem>>, vector<1x32xf32>
      %28 = vector.broadcast %27 : vector<1x32xf32> to vector<2x32xf32>
      %29 = arith.addf %26, %28 : vector<2x32xf32>
      %cst_16 = arith.constant 0.000000e+00 : f32
      %30 = vector.broadcast %cst_16 : f32 to vector<2x32xf32>
      %31 = arith.maximumf %29, %30 : vector<2x32xf32>
      %c0_17 = arith.constant 0 : index
      %c0_18 = arith.constant 0 : index
      %32 = vector.load %arg12[%c0_17, %c0_18] : memref<32x32xf32, #tpu.memory_space<vmem>>, vector<32x32xf32>
      %cst_19 = arith.constant dense<0.000000e+00> : vector<2x32xf32>
      %33 = tpu.matmul %31, %32, %cst_19 {dimension_numbers = #tpu.dot_dimension_numbers<[1], [0], [0], [1], [0, 0, 1, 1], [], []>} : vector<2x32xf32>, vector<32x32xf32>, vector<2x32xf32> -> vector<2x32xf32>
      %c0_20 = arith.constant 0 : index
      %c0_21 = arith.constant 0 : index
      %34 = vector.load %arg13[%c0_20, %c0_21] : memref<1x32xf32, #tpu.memory_space<vmem>>, vector<1x32xf32>
      %35 = vector.broadcast %34 : vector<1x32xf32> to vector<2x32xf32>
      %36 = arith.addf %33, %35 : vector<2x32xf32>
      %c0_22 = arith.constant 0 : index
      %c0_23 = arith.constant 0 : index
      %37 = vector.load %arg15[%c0_22, %c0_23] : memref<32x32xf32, #tpu.memory_space<vmem>>, vector<32x32xf32>
      %cst_24 = arith.constant dense<0.000000e+00> : vector<2x32xf32>
      %38 = tpu.matmul %36, %37, %cst_24 {dimension_numbers = #tpu.dot_dimension_numbers<[1], [0], [0], [1], [0, 0, 1, 1], [], []>} : vector<2x32xf32>, vector<32x32xf32>, vector<2x32xf32> -> vector<2x32xf32>
      %c0_25 = arith.constant 0 : index
      %c0_26 = arith.constant 0 : index
      %39 = vector.load %arg29[%c0_25, %c0_26] : memref<2x32xf32, #tpu.memory_space<vmem>>, vector<2x32xf32>
      tpu.vector_store %arg29[%c0_25, %c0_26], %38 {strides = array<i32>} : memref<2x32xf32, #tpu.memory_space<vmem>>, vector<2x32xf32>,
    } else {
    }
    %c1_i32 = arith.constant 1 : i32
    %17 = arith.cmpi eq, %arg0, %c1_i32 : i32
    %18 = arith.extui %17 : i1 to i32
    %c0_i32_7 = arith.constant 0 : i32
    %19 = arith.cmpi ne, %18, %c0_i32_7 : i32
    scf.if %19 {
      %c0_10 = arith.constant 0 : index
      %c0_11 = arith.constant 0 : index
      %24 = vector.load %arg5[%c0_10, %c0_11] : memref<1x16xi32, #tpu.memory_space<vmem>>, vector<1x16xi32>
      %25 = tpu.iota {dimensions = array<i32: 0>} : vector<2x16xi32>
      %26 = vector.broadcast %24 : vector<1x16xi32> to vector<2x16xi32>
      %27 = arith.cmpi eq, %25, %26 : vector<2x16xi32>
      %28 = arith.extui %27 : vector<2x16xi1> to vector<2x16xi32>
      %29 = arith.sitofp %28 : vector<2x16xi32> to vector<2x16xf32>
      %c0_12 = arith.constant 0 : index
      %c0_13 = arith.constant 0 : index
      %30 = vector.load %arg3[%c0_12, %c0_13] : memref<16x4xf32, #tpu.memory_space<vmem>>, vector<16x4xf32>
      %c0_14 = arith.constant 0 : index
      %c0_15 = arith.constant 0 : index
      %31 = vector.load %arg29[%c0_14, %c0_15] : memref<2x32xf32, #tpu.memory_space<vmem>>, vector<2x32xf32>
      %cst = arith.constant dense<0.000000e+00> : vector<16x32xf32>
      %32 = tpu.matmul %9, %31, %cst {dimension_numbers = #tpu.dot_dimension_numbers<[0], [0], [1], [1], [0, 1, 1, 1], [], []>} : vector<2x16xf32>, vector<2x32xf32>, vector<16x32xf32> -> vector<16x32xf32>
      %c0_16 = arith.constant 0 : index
      %c0_17 = arith.constant 0 : index
      %33 = vector.load %arg14[%c0_16, %c0_17] : memref<4x32xf32, #tpu.memory_space<vmem>>, vector<4x32xf32>
      %cst_18 = arith.constant dense<0.000000e+00> : vector<16x32xf32>
      %34 = tpu.matmul %30, %33, %cst_18 {dimension_numbers = #tpu.dot_dimension_numbers<[1], [0], [0], [1], [0, 0, 1, 1], [], []>} : vector<16x4xf32>, vector<4x32xf32>, vector<16x32xf32> -> vector<16x32xf32>
      %35 = arith.addf %34, %32 : vector<16x32xf32>
      %c0_19 = arith.constant 0 : index
      %c0_20 = arith.constant 0 : index
      %36 = vector.load %arg16[%c0_19, %c0_20] : memref<1x32xf32, #tpu.memory_space<vmem>>, vector<1x32xf32>
      %37 = vector.broadcast %36 : vector<1x32xf32> to vector<16x32xf32>
      %38 = arith.addf %35, %37 : vector<16x32xf32>
      %cst_21 = arith.constant 0.000000e+00 : f32
      %39 = vector.broadcast %cst_21 : f32 to vector<16x32xf32>
      %40 = arith.maximumf %38, %39 : vector<16x32xf32>
      %c0_22 = arith.constant 0 : index
      %c0_23 = arith.constant 0 : index
      %41 = vector.load %arg17[%c0_22, %c0_23] : memref<32x32xf32, #tpu.memory_space<vmem>>, vector<32x32xf32>
      %cst_24 = arith.constant dense<0.000000e+00> : vector<16x32xf32>
      %42 = tpu.matmul %40, %41, %cst_24 {dimension_numbers = #tpu.dot_dimension_numbers<[1], [0], [0], [1], [0, 0, 1, 1], [], []>} : vector<16x32xf32>, vector<32x32xf32>, vector<16x32xf32> -> vector<16x32xf32>
      %c0_25 = arith.constant 0 : index
      %c0_26 = arith.constant 0 : index
      %43 = vector.load %arg18[%c0_25, %c0_26] : memref<1x32xf32, #tpu.memory_space<vmem>>, vector<1x32xf32>
      %44 = vector.broadcast %43 : vector<1x32xf32> to vector<16x32xf32>
      %45 = arith.addf %42, %44 : vector<16x32xf32>
      %c0_27 = arith.constant 0 : index
      %c0_28 = arith.constant 0 : index
      %46 = vector.load %arg28[%c0_27, %c0_28] : memref<2x32xf32, #tpu.memory_space<vmem>>, vector<2x32xf32>
      %cst_29 = arith.constant dense<0.000000e+00> : vector<2x32xf32>
      %47 = tpu.matmul %29, %45, %cst_29 {dimension_numbers = #tpu.dot_dimension_numbers<[1], [0], [0], [1], [0, 0, 1, 1], [], []>} : vector<2x16xf32>, vector<16x32xf32>, vector<2x32xf32> -> vector<2x32xf32>
      %48 = arith.addf %46, %47 : vector<2x32xf32>
      %c0_30 = arith.constant 0 : index
      %c0_31 = arith.constant 0 : index
      %49 = vector.load %arg28[%c0_30, %c0_31] : memref<2x32xf32, #tpu.memory_space<vmem>>, vector<2x32xf32>
      tpu.vector_store %arg28[%c0_30, %c0_31], %48 {strides = array<i32>} : memref<2x32xf32, #tpu.memory_space<vmem>>, vector<2x32xf32>,
    } else {
    }
    %c1_i32_8 = arith.constant 1 : i32
    %20 = arith.cmpi eq, %arg0, %c1_i32_8 : i32
    %21 = arith.andi %20, %0 : i1
    %22 = arith.extui %21 : i1 to i32
    %c0_i32_9 = arith.constant 0 : i32
    %23 = arith.cmpi ne, %22, %c0_i32_9 : i32
    scf.if %23 {
      %c0_10 = arith.constant 0 : index
      %c0_11 = arith.constant 0 : index
      %24 = vector.load %arg28[%c0_10, %c0_11] : memref<2x32xf32, #tpu.memory_space<vmem>>, vector<2x32xf32>
      %c0_12 = arith.constant 0 : index
      %c0_13 = arith.constant 0 : index
      %25 = vector.load %arg19[%c0_12, %c0_13] : memref<32x32xf32, #tpu.memory_space<vmem>>, vector<32x32xf32>
      %cst = arith.constant dense<0.000000e+00> : vector<2x32xf32>
      %26 = tpu.matmul %24, %25, %cst {dimension_numbers = #tpu.dot_dimension_numbers<[1], [0], [0], [1], [0, 0, 1, 1], [], []>} : vector<2x32xf32>, vector<32x32xf32>, vector<2x32xf32> -> vector<2x32xf32>
      %c0_14 = arith.constant 0 : index
      %c0_15 = arith.constant 0 : index
      %27 = vector.load %arg20[%c0_14, %c0_15] : memref<1x32xf32, #tpu.memory_space<vmem>>, vector<1x32xf32>
      %28 = vector.broadcast %27 : vector<1x32xf32> to vector<2x32xf32>
      %29 = arith.addf %26, %28 : vector<2x32xf32>
      %cst_16 = arith.constant 0.000000e+00 : f32
      %30 = vector.broadcast %cst_16 : f32 to vector<2x32xf32>
      %31 = arith.maximumf %29, %30 : vector<2x32xf32>
      %c0_17 = arith.constant 0 : index
      %c0_18 = arith.constant 0 : index
      %32 = vector.load %arg21[%c0_17, %c0_18] : memref<32x32xf32, #tpu.memory_space<vmem>>, vector<32x32xf32>
      %cst_19 = arith.constant dense<0.000000e+00> : vector<2x32xf32>
      %33 = tpu.matmul %31, %32, %cst_19 {dimension_numbers = #tpu.dot_dimension_numbers<[1], [0], [0], [1], [0, 0, 1, 1], [], []>} : vector<2x32xf32>, vector<32x32xf32>, vector<2x32xf32> -> vector<2x32xf32>
      %c0_20 = arith.constant 0 : index
      %c0_21 = arith.constant 0 : index
      %34 = vector.load %arg22[%c0_20, %c0_21] : memref<1x32xf32, #tpu.memory_space<vmem>>, vector<1x32xf32>
      %35 = vector.broadcast %34 : vector<1x32xf32> to vector<2x32xf32>
      %36 = arith.addf %33, %35 : vector<2x32xf32>
      %c0_22 = arith.constant 0 : index
      %c0_23 = arith.constant 0 : index
      %37 = vector.load %arg23[%c0_22, %c0_23] : memref<32x32xf32, #tpu.memory_space<vmem>>, vector<32x32xf32>
      %cst_24 = arith.constant dense<0.000000e+00> : vector<2x32xf32>
      %38 = tpu.matmul %36, %37, %cst_24 {dimension_numbers = #tpu.dot_dimension_numbers<[1], [0], [0], [1], [0, 0, 1, 1], [], []>} : vector<2x32xf32>, vector<32x32xf32>, vector<2x32xf32> -> vector<2x32xf32>
      %c0_25 = arith.constant 0 : index
      %c0_26 = arith.constant 0 : index
      %39 = vector.load %arg24[%c0_25, %c0_26] : memref<1x32xf32, #tpu.memory_space<vmem>>, vector<1x32xf32>
      %40 = vector.broadcast %39 : vector<1x32xf32> to vector<2x32xf32>
      %41 = arith.addf %38, %40 : vector<2x32xf32>
      %cst_27 = arith.constant 0.000000e+00 : f32
      %42 = vector.broadcast %cst_27 : f32 to vector<2x32xf32>
      %43 = arith.maximumf %41, %42 : vector<2x32xf32>
      %c0_28 = arith.constant 0 : index
      %c0_29 = arith.constant 0 : index
      %44 = vector.load %arg25[%c0_28, %c0_29] : memref<32x128xf32, #tpu.memory_space<vmem>>, vector<32x128xf32>
      %cst_30 = arith.constant dense<0.000000e+00> : vector<2x128xf32>
      %45 = tpu.matmul %43, %44, %cst_30 {dimension_numbers = #tpu.dot_dimension_numbers<[1], [0], [0], [1], [0, 0, 1, 1], [], []>} : vector<2x32xf32>, vector<32x128xf32>, vector<2x128xf32> -> vector<2x128xf32>
      %c0_31 = arith.constant 0 : index
      %c0_32 = arith.constant 0 : index
      %46 = vector.load %arg26[%c0_31, %c0_32] : memref<1x128xf32, #tpu.memory_space<vmem>>, vector<1x128xf32>
      %47 = vector.broadcast %46 : vector<1x128xf32> to vector<2x128xf32>
      %48 = arith.addf %45, %47 : vector<2x128xf32>
      %c0_33 = arith.constant 0 : index
      %c0_34 = arith.constant 0 : index
      %49 = vector.load %arg27[%c0_33, %c0_34] : memref<2x128xf32, #tpu.memory_space<vmem>>, vector<2x128xf32>
      tpu.vector_store %arg27[%c0_33, %c0_34], %48 {strides = array<i32>} : memref<2x128xf32, #tpu.memory_space<vmem>>, vector<2x128xf32>,
    } else {
    }
    return
  }
  func.func @transform_0(%arg0: i32, %arg1: i32) -> (i32, i32) {
    %c1_i32 = arith.constant 1 : i32
    %0 = arith.subi %c1_i32, %arg0 : i32
    %1 = arith.muli %0, %arg1 : i32
    %c0_i32 = arith.constant 0 : i32
    %c0_i32_0 = arith.constant 0 : i32
    return %1, %c0_i32 : i32, i32
  }
  func.func @transform_1(%arg0: i32, %arg1: i32) -> (i32, i32) {
    %0 = arith.muli %arg0, %arg1 : i32
    %c0_i32 = arith.constant 0 : i32
    %c0_i32_0 = arith.constant 0 : i32
    return %0, %c0_i32 : i32, i32
  }
  func.func @transform_2(%arg0: i32, %arg1: i32) -> (i32, i32) {
    %c0_i32 = arith.constant 0 : i32
    %c0_i32_0 = arith.constant 0 : i32
    return %c0_i32, %arg1 : i32, i32
  }
  func.func @transform_3(%arg0: i32, %arg1: i32) -> (i32, i32) {
    %0 = arith.muli %arg0, %arg1 : i32
    %c0_i32 = arith.constant 0 : i32
    %c0_i32_0 = arith.constant 0 : i32
    return %c0_i32, %0 : i32, i32
  }
  func.func @transform_4(%arg0: i32, %arg1: i32) -> (i32, i32) {
    %c0_i32 = arith.constant 0 : i32
    %c0_i32_0 = arith.constant 0 : i32
    %c0_i32_1 = arith.constant 0 : i32
    return %c0_i32, %c0_i32_0 : i32, i32
  }
  func.func @transform_5(%arg0: i32, %arg1: i32) -> (i32, i32) {
    %c0_i32 = arith.constant 0 : i32
    %c0_i32_0 = arith.constant 0 : i32
    %c0_i32_1 = arith.constant 0 : i32
    return %c0_i32, %c0_i32_0 : i32, i32
  }
  func.func @transform_6(%arg0: i32, %arg1: i32) -> (i32, i32) {
    %c0_i32 = arith.constant 0 : i32
    %c0_i32_0 = arith.constant 0 : i32
    %c0_i32_1 = arith.constant 0 : i32
    return %c0_i32, %c0_i32_0 : i32, i32
  }
  func.func @transform_7(%arg0: i32, %arg1: i32) -> (i32, i32) {
    %c0_i32 = arith.constant 0 : i32
    %c0_i32_0 = arith.constant 0 : i32
    %c0_i32_1 = arith.constant 0 : i32
    return %c0_i32, %c0_i32_0 : i32, i32
  }
  func.func @transform_8(%arg0: i32, %arg1: i32) -> (i32, i32) {
    %c0_i32 = arith.constant 0 : i32
    %c0_i32_0 = arith.constant 0 : i32
    %c0_i32_1 = arith.constant 0 : i32
    return %c0_i32, %c0_i32_0 : i32, i32
  }
  func.func @transform_9(%arg0: i32, %arg1: i32) -> (i32, i32) {
    %c0_i32 = arith.constant 0 : i32
    %c0_i32_0 = arith.constant 0 : i32
    %c0_i32_1 = arith.constant 0 : i32
    return %c0_i32, %c0_i32_0 : i32, i32
  }
  func.func @transform_10(%arg0: i32, %arg1: i32) -> (i32, i32) {
    %c0_i32 = arith.constant 0 : i32
    %c0_i32_0 = arith.constant 0 : i32
    %c0_i32_1 = arith.constant 0 : i32
    return %c0_i32, %c0_i32_0 : i32, i32
  }
  func.func @transform_11(%arg0: i32, %arg1: i32) -> (i32, i32) {
    %c0_i32 = arith.constant 0 : i32
    %c0_i32_0 = arith.constant 0 : i32
    %c0_i32_1 = arith.constant 0 : i32
    return %c0_i32, %c0_i32_0 : i32, i32
  }
  func.func @transform_12(%arg0: i32, %arg1: i32) -> (i32, i32) {
    %c0_i32 = arith.constant 0 : i32
    %c0_i32_0 = arith.constant 0 : i32
    %c0_i32_1 = arith.constant 0 : i32
    return %c0_i32, %c0_i32_0 : i32, i32
  }
  func.func @transform_13(%arg0: i32, %arg1: i32) -> (i32, i32) {
    %c0_i32 = arith.constant 0 : i32
    %c0_i32_0 = arith.constant 0 : i32
    %c0_i32_1 = arith.constant 0 : i32
    return %c0_i32, %c0_i32_0 : i32, i32
  }
  func.func @transform_14(%arg0: i32, %arg1: i32) -> (i32, i32) {
    %c0_i32 = arith.constant 0 : i32
    %c0_i32_0 = arith.constant 0 : i32
    %c0_i32_1 = arith.constant 0 : i32
    return %c0_i32, %c0_i32_0 : i32, i32
  }
  func.func @transform_15(%arg0: i32, %arg1: i32) -> (i32, i32) {
    %c0_i32 = arith.constant 0 : i32
    %c0_i32_0 = arith.constant 0 : i32
    %c0_i32_1 = arith.constant 0 : i32
    return %c0_i32, %c0_i32_0 : i32, i32
  }
  func.func @transform_16(%arg0: i32, %arg1: i32) -> (i32, i32) {
    %c0_i32 = arith.constant 0 : i32
    %c0_i32_0 = arith.constant 0 : i32
    %c0_i32_1 = arith.constant 0 : i32
    return %c0_i32, %c0_i32_0 : i32, i32
  }
  func.func @transform_17(%arg0: i32, %arg1: i32) -> (i32, i32) {
    %c0_i32 = arith.constant 0 : i32
    %c0_i32_0 = arith.constant 0 : i32
    %c0_i32_1 = arith.constant 0 : i32
    return %c0_i32, %c0_i32_0 : i32, i32
  }
  func.func @transform_18(%arg0: i32, %arg1: i32) -> (i32, i32) {
    %c0_i32 = arith.constant 0 : i32
    %c0_i32_0 = arith.constant 0 : i32
    %c0_i32_1 = arith.constant 0 : i32
    return %c0_i32, %c0_i32_0 : i32, i32
  }
  func.func @transform_19(%arg0: i32, %arg1: i32) -> (i32, i32) {
    %c0_i32 = arith.constant 0 : i32
    %c0_i32_0 = arith.constant 0 : i32
    %c0_i32_1 = arith.constant 0 : i32
    return %c0_i32, %c0_i32_0 : i32, i32
  }
  func.func @transform_20(%arg0: i32, %arg1: i32) -> (i32, i32) {
    %c0_i32 = arith.constant 0 : i32
    %c0_i32_0 = arith.constant 0 : i32
    %c0_i32_1 = arith.constant 0 : i32
    return %c0_i32, %c0_i32_0 : i32, i32
  }
  func.func @transform_21(%arg0: i32, %arg1: i32) -> (i32, i32) {
    %c0_i32 = arith.constant 0 : i32
    %c0_i32_0 = arith.constant 0 : i32
    %c0_i32_1 = arith.constant 0 : i32
    return %c0_i32, %c0_i32_0 : i32, i32
  }
  func.func @transform_22(%arg0: i32, %arg1: i32) -> (i32, i32) {
    %c0_i32 = arith.constant 0 : i32
    %c0_i32_0 = arith.constant 0 : i32
    %c0_i32_1 = arith.constant 0 : i32
    return %c0_i32, %c0_i32_0 : i32, i32
  }
  func.func @transform_23(%arg0: i32, %arg1: i32) -> (i32, i32) {
    %c0_i32 = arith.constant 0 : i32
    %c0_i32_0 = arith.constant 0 : i32
    %c0_i32_1 = arith.constant 0 : i32
    return %c0_i32, %c0_i32_0 : i32, i32
  }
  func.func @transform_24(%arg0: i32, %arg1: i32) -> (i32, i32) {
    %c0_i32 = arith.constant 0 : i32
    %c0_i32_0 = arith.constant 0 : i32
    %c0_i32_1 = arith.constant 0 : i32
    return %c0_i32, %c0_i32_0 : i32, i32
  }
  func.func @transform_25(%arg0: i32, %arg1: i32) -> (i32, i32) {
    %c0_i32 = arith.constant 0 : i32
    %c0_i32_0 = arith.constant 0 : i32
    %c0_i32_1 = arith.constant 0 : i32
    return %c0_i32, %c0_i32_0 : i32, i32
  }
}

</mosaic_0001>

<llo_original>
// kernel: tpu_custom_call.1
$region0: #{tpu_custom_call.1}
  #allocation0 [shape = 'u32[]', space=smem, size = 0x4, offset = 0x4, fixed_abs, tag = 'smem constant byte address 0x4 - core index']
  #allocation1 [shape = 'u32[144,128]{1,0:T(1,128)}', space=vmem, size = 0x12000, scoped, tag = 'internal scratch']
  #allocation2 [shape = 'f32[2,32]{1,0:T(2,128)}', space=vmem, size = 0x400, scoped, tag = 'scratch operand']
  #allocation3 [shape = 'f32[2,32]{1,0:T(2,128)}', space=vmem, size = 0x400, scoped, tag = 'scratch operand']
  %s0 = inlined_call_operand.vmem [shape: f32[16,4], index: 0, kind: input, shape index: {}]
  %s1 = inlined_call_operand.vmem [shape: f32[16,4], index: 1, kind: input, shape index: {}]
  %s2 = inlined_call_operand.vmem [shape: s32[1,16], index: 2, kind: input, shape index: {}]
  %s3 = inlined_call_operand.hbm [shape: s32[1,16], index: 3, kind: input, shape index: {}]
  %s4 = inlined_call_operand.hbm [shape: f32[4,32], index: 4, kind: input, shape index: {}]
  %s5 = inlined_call_operand.hbm [shape: f32[1,32], index: 5, kind: input, shape index: {}]
  %s6 = inlined_call_operand.vmem [shape: f32[32,32], index: 6, kind: input, shape index: {}]
  %s7 = inlined_call_operand.hbm [shape: f32[1,32], index: 7, kind: input, shape index: {}]
  %s8 = inlined_call_operand.hbm [shape: f32[32,32], index: 8, kind: input, shape index: {}]
  %s9 = inlined_call_operand.hbm [shape: f32[1,32], index: 9, kind: input, shape index: {}]
  %s10 = inlined_call_operand.hbm [shape: f32[32,32], index: 10, kind: input, shape index: {}]
  %s11 = inlined_call_operand.hbm [shape: f32[1,32], index: 11, kind: input, shape index: {}]
  %s12 = inlined_call_operand.hbm [shape: f32[4,32], index: 12, kind: input, shape index: {}]
  %s13 = inlined_call_operand.hbm [shape: f32[32,32], index: 13, kind: input, shape index: {}]
  %s14 = inlined_call_operand.hbm [shape: f32[1,32], index: 14, kind: input, shape index: {}]
  %s15 = inlined_call_operand.vmem [shape: f32[32,32], index: 15, kind: input, shape index: {}]
  %s16 = inlined_call_operand.vmem [shape: f32[1,32], index: 16, kind: input, shape index: {}]
  %s17 = inlined_call_operand.hbm [shape: f32[32,32], index: 17, kind: input, shape index: {}]
  %s18 = inlined_call_operand.vmem [shape: f32[1,32], index: 18, kind: input, shape index: {}]
  %s19 = inlined_call_operand.hbm [shape: f32[32,32], index: 19, kind: input, shape index: {}]
  %s20 = inlined_call_operand.vmem [shape: f32[1,32], index: 20, kind: input, shape index: {}]
  %s21 = inlined_call_operand.hbm [shape: f32[32,32], index: 21, kind: input, shape index: {}]
  %s22 = inlined_call_operand.vmem [shape: f32[1,32], index: 22, kind: input, shape index: {}]
  %s23 = inlined_call_operand.hbm [shape: f32[32,128], index: 23, kind: input, shape index: {}]
  %s24 = inlined_call_operand.vmem [shape: f32[1,128], index: 24, kind: input, shape index: {}]
  %s25 = inlined_call_operand.hbm [shape: f32[2,128], index: 25, kind: output, shape index: {}]
  %s26 = sld [smem:[#allocation0]]
  $region213: #{tpu_custom_call.1} parent=0
    _
  %s28 = ssub.s32 1, %s26
  %s29 = scalar_select 0, %s28, %s26
  $region1: #{tpu_custom_call.1} parent=0
    #allocation4 [shape = 'u8[1024]{0}', space=vmem, size = 0x400, scoped, tag = 'input window, operand 3']
    #allocation5 [shape = 's32[2]{0}', space=sflag, size = 0x8, scoped, tag = 'scoped memory for tpu_custom_call.1']
    #allocation6 [shape = 's32[2]{0}', space=sflag, size = 0x8, scoped, tag = 'scoped memory for tpu_custom_call.1']
    #allocation7 [shape = 'u8[2048]{0}', space=vmem, size = 0x800, scoped, tag = 'input window, operand 4, single buffered']
    #allocation8 [shape = 's32[1]{0}', space=sflag, size = 0x4, scoped, tag = 'scoped memory for tpu_custom_call.1']
    #allocation9 [shape = 'u8[512]{0}', space=vmem, size = 0x400, scoped, tag = 'input window, operand 5, single buffered']
    #allocation10 [shape = 'u8[512]{0}', space=vmem, size = 0x400, scoped, tag = 'input window, operand 7, single buffered']
    #allocation11 [shape = 's32[1]{0}', space=sflag, size = 0x4, scoped, tag = 'scoped memory for tpu_custom_call.1']
    #allocation12 [shape = 'u8[16384]{0}', space=vmem, size = 0x4000, scoped, tag = 'input window, operand 8, single buffered']
    #allocation13 [shape = 'u8[512]{0}', space=vmem, size = 0x400, scoped, tag = 'input window, operand 9, single buffered']
    #allocation14 [shape = 's32[1]{0}', space=sflag, size = 0x4, scoped, tag = 'scoped memory for tpu_custom_call.1']
    #allocation15 [shape = 'u8[16384]{0}', space=vmem, size = 0x4000, scoped, tag = 'input window, operand 10, single buffered']
    #allocation16 [shape = 'u8[512]{0}', space=vmem, size = 0x400, scoped, tag = 'input window, operand 11, single buffered']
    #allocation17 [shape = 's32[1]{0}', space=sflag, size = 0x4, scoped, tag = 'scoped memory for tpu_custom_call.1']
    #allocation18 [shape = 'u8[2048]{0}', space=vmem, size = 0x800, scoped, tag = 'input window, operand 12, single buffered']
    #allocation19 [shape = 'u8[16384]{0}', space=vmem, size = 0x4000, scoped, tag = 'input window, operand 13, single buffered']
    #allocation20 [shape = 's32[1]{0}', space=sflag, size = 0x4, scoped, tag = 'scoped memory for tpu_custom_call.1']
    #allocation21 [shape = 'u8[512]{0}', space=vmem, size = 0x400, scoped, tag = 'input window, operand 14, single buffered']
    #allocation22 [shape = 'u8[16384]{0}', space=vmem, size = 0x4000, scoped, tag = 'input window, operand 17, single buffered']
    #allocation23 [shape = 's32[1]{0}', space=sflag, size = 0x4, scoped, tag = 'scoped memory for tpu_custom_call.1']
    #allocation24 [shape = 'u8[16384]{0}', space=vmem, size = 0x4000, scoped, tag = 'input window, operand 19, single buffered']
    #allocation25 [shape = 'u8[16384]{0}', space=vmem, size = 0x4000, scoped, tag = 'input window, operand 21, single buffered']
    #allocation26 [shape = 's32[1]{0}', space=sflag, size = 0x4, scoped, tag = 'scoped memory for tpu_custom_call.1']
    #allocation27 [shape = 'u8[16384]{0}', space=vmem, size = 0x4000, scoped, tag = 'input window, operand 23, single buffered']
    #allocation28 [shape = 'u8[1024]{0}', space=vmem, size = 0x400, scoped, tag = 'output window, operand 0, single buffered']
    %30 = vsyncpa [#allocation5], 0
    %s31 = scalar_lea.sflag [#allocation5], 1
    %32 = vsyncpa %s31, 0
    %33 = vsyncpa [#allocation8], 0
    %34 = vsyncpa [#allocation11], 0
    %35 = vsyncpa [#allocation14], 0
    %36 = vsyncpa [#allocation17], 0
    %37 = vsyncpa [#allocation20], 0
    %38 = vsyncpa [#allocation23], 0
    %39 = vsyncpa [#allocation26], 0
    %40 = vsyncpa [#allocation6], 0
    loop: start=0, step=1, limit=4
    $region2: #{tpu_custom_call.1} parent=1 // loop_pre_header
      _
    $region3: #{tpu_custom_call.1} parent=1 // loop_header
      %s42 = sphi 0, %s46
      %p43 = scmp.ge.s32.totalorder %s42, 4
      %s49 = sphi 0, %s61
      %s50 = sphi 0, %s57
      %s51 = sphi 0, %s49
      %s52 = sphi 0, %s50
      %s53 = sphi 0, %s51
      %s54 = sphi 0, %s52
      %s68 = sphi 0, %s70
      %s71 = sphi 0, %s68
      %s72 = sphi 0, %s71
      %s88 = sphi 0, %s72
      %s96 = sphi 0, %s98
      %s99 = sphi 0, %s96
      %s100 = sphi 0, %s99
      %s116 = sphi 0, %s100
      %s122 = sphi 0, %s124
      %s125 = sphi 0, %s122
      %s126 = sphi 0, %s125
      %s142 = sphi 0, %s126
      %s150 = sphi 0, %s152
      %s153 = sphi 0, %s150
      %s154 = sphi 0, %s153
      %s170 = sphi 0, %s154
      %s174 = sphi 0, %s174
      %s176 = sphi 0, %s174
      %s177 = sphi 0, %s176
      %s191 = sphi 0, %s177
      %s195 = sphi 0, %s195
      %s197 = sphi 0, %s195
      %s198 = sphi 0, %s197
      %s212 = sphi 0, %s198
      %s216 = sphi 0, %s216
      %s218 = sphi 0, %s216
      %s219 = sphi 0, %s218
      %s233 = sphi 0, %s219
      %s237 = sphi 0, %s237
      %s239 = sphi 0, %s237
      %s240 = sphi 0, %s239
      %s254 = sphi 0, %s240
      %s258 = sphi 0, %s258
      %s260 = sphi 0, %s258
      %s261 = sphi 0, %s260
      %s275 = sphi 0, %s261
      %s279 = sphi 0, %s279
      %s281 = sphi 0, %s279
      %s282 = sphi 0, %s281
      %s296 = sphi 0, %s282
      %s300 = sphi 0, %s300
      %s302 = sphi 0, %s300
      %s303 = sphi 0, %s302
      %s317 = sphi 0, %s303
      %s321 = sphi 0, %s321
      %s323 = sphi 0, %s321
      %s324 = sphi 0, %s323
      %s338 = sphi 0, %s324
      %s342 = sphi 0, %s342
      %s344 = sphi 0, %s342
      %s345 = sphi 0, %s344
      %s359 = sphi 0, %s345
      %s363 = sphi 0, %s363
      %s365 = sphi 0, %s363
      %s366 = sphi 0, %s365
      %s380 = sphi 0, %s366
      %s384 = sphi 0, %s384
      %s386 = sphi 0, %s384
      %s387 = sphi 0, %s386
      %s401 = sphi 0, %s387
      %s405 = sphi 0, %s405
      %s407 = sphi 0, %s405
      %s408 = sphi 0, %s407
      %s422 = sphi 0, %s408
      %s426 = sphi 0, %s426
      %s428 = sphi 0, %s426
      %s429 = sphi 0, %s428
      %s443 = sphi 0, %s429
      %s447 = sphi 0, %s447
      %s449 = sphi 0, %s447
      %s450 = sphi 0, %s449
      %s464 = sphi 0, %s450
      %s468 = sphi 0, %s468
      %s470 = sphi 0, %s468
      %s471 = sphi 0, %s470
      %s485 = sphi 0, %s471
      %s489 = sphi 0, %s489
      %s491 = sphi 0, %s489
      %s492 = sphi 0, %s491
      %s506 = sphi 0, %s492
      %s510 = sphi 0, %s510
      %s512 = sphi 0, %s510
      %s513 = sphi 0, %s512
      %s527 = sphi 0, %s513
      %s531 = sphi 0, %s531
      %s533 = sphi 0, %s531
      %s534 = sphi 0, %s533
      %s548 = sphi 0, %s534
      %s552 = sphi 0, %s552
      %s554 = sphi 0, %s552
      %s555 = sphi 0, %s554
      %s569 = sphi 0, %s555
      %s573 = sphi 0, %s573
      %s575 = sphi 0, %s573
      %s576 = sphi 0, %s575
      %s590 = sphi 0, %s576
      %s594 = sphi 0, %s594
      %s596 = sphi 0, %s594
      %s597 = sphi 0, %s596
      %s611 = sphi 0, %s597
      %s615 = sphi 0, %s615
      %s617 = sphi 0, %s615
      %s618 = sphi 0, %s617
      %s632 = sphi 0, %s618
    $region4: #{tpu_custom_call.1} parent=1 // loop_header_branch
      %45 = sbr.rel (%p43) target = $region8
    $region5: #{tpu_custom_call.1} parent=1 // loop_body
      %s47 = ssub.s32 %s42, 1
      %s48 = ssub.s32 %s42, 2
      %s55 = sadd.s32 1, %s50
      %p56 = scmp.ge.s32.totalorder %s55, 1
      %s57 = scalar_select %p56, 0, %s55
      %s58 = sadd.s32 1, %s49
      %s59 = scalar_select %p56, %s58, %s49
      %p60 = scmp.ge.s32.totalorder %s59, 2
      %s61 = scalar_select %p60, 0, %s59
      %s62 = ssub.s32 1, %s49
      %s63 = smul.u32 %s62, %s50
      %s64 = ssub.s32 1, %s61
      %s65 = smul.u32 %s64, %s57
      %s66 = ssub.s32 %s63, %s65
      %p67 = scmp.eq.s32.totalorder %s66, 0
      %s69 = sadd.s32 %s68, 1
      %s70 = scalar_select %p67, %s68, %s69
      %p73 = pneg %p67
      %p74 = scmp.eq.s32.totalorder %s42, 1
      %p75 = por %p73, %p74
      %p76 = scmp.ne.s32.totalorder %s68, %s71
      %p77 = scmp.eq.s32.totalorder %s42, 0
      %p78 = por %p76, %p77
      %p79 = scmp.ne.s32.totalorder %s68, %s71
      %p80 = scmp.eq.s32.totalorder %s47, 1
      %p81 = por %p79, %p80
      %p82 = scmp.ne.s32.totalorder %s71, %s72
      %p83 = scmp.eq.s32.totalorder %s47, 0
      %p84 = por %p82, %p83
      %p85 = scmp.ne.s32.totalorder %s71, %s72
      %p86 = scmp.eq.s32.totalorder %s48, 1
      %p87 = por %p85, %p86
      %p89 = scmp.ne.s32.totalorder %s72, %s88
      %p90 = scmp.eq.s32.totalorder %s48, 0
      %p91 = por %p89, %p90
      %s92 = smul.u32 %s49, %s50
      %s93 = smul.u32 %s61, %s57
      %s94 = ssub.s32 %s92, %s93
      %p95 = scmp.eq.s32.totalorder %s94, 0
      %s97 = sadd.s32 %s96, 1
      %s98 = scalar_select %p95, %s96, %s97
      %p101 = pneg %p95
      %p102 = scmp.eq.s32.totalorder %s42, 1
      %p103 = por %p101, %p102
      %p104 = scmp.ne.s32.totalorder %s96, %s99
      %p105 = scmp.eq.s32.totalorder %s42, 0
      %p106 = por %p104, %p105
      %p107 = scmp.ne.s32.totalorder %s96, %s99
      %p108 = scmp.eq.s32.totalorder %s47, 1
      %p109 = por %p107, %p108
      %p110 = scmp.ne.s32.totalorder %s99, %s100
      %p111 = scmp.eq.s32.totalorder %s47, 0
      %p112 = por %p110, %p111
      %p113 = scmp.ne.s32.totalorder %s99, %s100
      %p114 = scmp.eq.s32.totalorder %s48, 1
      %p115 = por %p113, %p114
      %p117 = scmp.ne.s32.totalorder %s100, %s116
      %p118 = scmp.eq.s32.totalorder %s48, 0
      %p119 = por %p117, %p118
      %s120 = ssub.s32 %s50, %s57
      %p121 = scmp.eq.s32.totalorder %s120, 0
      %s123 = sadd.s32 %s122, 1
      %s124 = scalar_select %p121, %s122, %s123
      %p127 = pneg %p121
      %p128 = scmp.eq.s32.totalorder %s42, 1
      %p129 = por %p127, %p128
      %p130 = scmp.ne.s32.totalorder %s122, %s125
      %p131 = scmp.eq.s32.totalorder %s42, 0
      %p132 = por %p130, %p131
      %p133 = scmp.ne.s32.totalorder %s122, %s125
      %p134 = scmp.eq.s32.totalorder %s47, 1
      %p135 = por %p133, %p134
      %p136 = scmp.ne.s32.totalorder %s125, %s126
      %p137 = scmp.eq.s32.totalorder %s47, 0
      %p138 = por %p136, %p137
      %p139 = scmp.ne.s32.totalorder %s125, %s126
      %p140 = scmp.eq.s32.totalorder %s48, 1
      %p141 = por %p139, %p140
      %p143 = scmp.ne.s32.totalorder %s126, %s142
      %p144 = scmp.eq.s32.totalorder %s48, 0
      %p145 = por %p143, %p144
      %s146 = smul.u32 %s49, %s50
      %s147 = smul.u32 %s61, %s57
      %s148 = ssub.s32 %s146, %s147
      %p149 = scmp.eq.s32.totalorder %s148, 0
      %s151 = sadd.s32 %s150, 1
      %s152 = scalar_select %p149, %s150, %s151
      %p155 = pneg %p149
      %p156 = scmp.eq.s32.totalorder %s42, 1
      %p157 = por %p155, %p156
      %p158 = scmp.ne.s32.totalorder %s150, %s153
      %p159 = scmp.eq.s32.totalorder %s42, 0
      %p160 = por %p158, %p159
      %p161 = scmp.ne.s32.totalorder %s150, %s153
      %p162 = scmp.eq.s32.totalorder %s47, 1
      %p163 = por %p161, %p162
      %p164 = scmp.ne.s32.totalorder %s153, %s154
      %p165 = scmp.eq.s32.totalorder %s47, 0
      %p166 = por %p164, %p165
      %p167 = scmp.ne.s32.totalorder %s153, %s154
      %p168 = scmp.eq.s32.totalorder %s48, 1
      %p169 = por %p167, %p168
      %p171 = scmp.ne.s32.totalorder %s154, %s170
      %p172 = scmp.eq.s32.totalorder %s48, 0
      %p173 = por %p171, %p172
      %s175 = sadd.s32 %s174, 1
      %p178 = scmp.eq.s32.totalorder %s42, 1
      %p179 = scmp.ne.s32.totalorder %s174, %s176
      %p180 = scmp.eq.s32.totalorder %s42, 0
      %p181 = por %p179, %p180
      %p182 = scmp.ne.s32.totalorder %s174, %s176
      %p183 = scmp.eq.s32.totalorder %s47, 1
      %p184 = por %p182, %p183
      %p185 = scmp.ne.s32.totalorder %s176, %s177
      %p186 = scmp.eq.s32.totalorder %s47, 0
      %p187 = por %p185, %p186
      %p188 = scmp.ne.s32.totalorder %s176, %s177
      %p189 = scmp.eq.s32.totalorder %s48, 1
      %p190 = por %p188, %p189
      %p192 = scmp.ne.s32.totalorder %s177, %s191
      %p193 = scmp.eq.s32.totalorder %s48, 0
      %p194 = por %p192, %p193
      %s196 = sadd.s32 %s195, 1
      %p199 = scmp.eq.s32.totalorder %s42, 1
      %p200 = scmp.ne.s32.totalorder %s195, %s197
      %p201 = scmp.eq.s32.totalorder %s42, 0
      %p202 = por %p200, %p201
      %p203 = scmp.ne.s32.totalorder %s195, %s197
      %p204 = scmp.eq.s32.totalorder %s47, 1
      %p205 = por %p203, %p204
      %p206 = scmp.ne.s32.totalorder %s197, %s198
      %p207 = scmp.eq.s32.totalorder %s47, 0
      %p208 = por %p206, %p207
      %p209 = scmp.ne.s32.totalorder %s197, %s198
      %p210 = scmp.eq.s32.totalorder %s48, 1
      %p211 = por %p209, %p210
      %p213 = scmp.ne.s32.totalorder %s198, %s212
      %p214 = scmp.eq.s32.totalorder %s48, 0
      %p215 = por %p213, %p214
      %s217 = sadd.s32 %s216, 1
      %p220 = scmp.eq.s32.totalorder %s42, 1
      %p221 = scmp.ne.s32.totalorder %s216, %s218
      %p222 = scmp.eq.s32.totalorder %s42, 0
      %p223 = por %p221, %p222
      %p224 = scmp.ne.s32.totalorder %s216, %s218
      %p225 = scmp.eq.s32.totalorder %s47, 1
      %p226 = por %p224, %p225
      %p227 = scmp.ne.s32.totalorder %s218, %s219
      %p228 = scmp.eq.s32.totalorder %s47, 0
      %p229 = por %p227, %p228
      %p230 = scmp.ne.s32.totalorder %s218, %s219
      %p231 = scmp.eq.s32.totalorder %s48, 1
      %p232 = por %p230, %p231
      %p234 = scmp.ne.s32.totalorder %s219, %s233
      %p235 = scmp.eq.s32.totalorder %s48, 0
      %p236 = por %p234, %p235
      %s238 = sadd.s32 %s237, 1
      %p241 = scmp.eq.s32.totalorder %s42, 1
      %p242 = scmp.ne.s32.totalorder %s237, %s239
      %p243 = scmp.eq.s32.totalorder %s42, 0
      %p244 = por %p242, %p243
      %p245 = scmp.ne.s32.totalorder %s237, %s239
      %p246 = scmp.eq.s32.totalorder %s47, 1
      %p247 = por %p245, %p246
      %p248 = scmp.ne.s32.totalorder %s239, %s240
      %p249 = scmp.eq.s32.totalorder %s47, 0
      %p250 = por %p248, %p249
      %p251 = scmp.ne.s32.totalorder %s239, %s240
      %p252 = scmp.eq.s32.totalorder %s48, 1
      %p253 = por %p251, %p252
      %p255 = scmp.ne.s32.totalorder %s240, %s254
      %p256 = scmp.eq.s32.totalorder %s48, 0
      %p257 = por %p255, %p256
      %s259 = sadd.s32 %s258, 1
      %p262 = scmp.eq.s32.totalorder %s42, 1
      %p263 = scmp.ne.s32.totalorder %s258, %s260
      %p264 = scmp.eq.s32.totalorder %s42, 0
      %p265 = por %p263, %p264
      %p266 = scmp.ne.s32.totalorder %s258, %s260
      %p267 = scmp.eq.s32.totalorder %s47, 1
      %p268 = por %p266, %p267
      %p269 = scmp.ne.s32.totalorder %s260, %s261
      %p270 = scmp.eq.s32.totalorder %s47, 0
      %p271 = por %p269, %p270
      %p272 = scmp.ne.s32.totalorder %s260, %s261
      %p273 = scmp.eq.s32.totalorder %s48, 1
      %p274 = por %p272, %p273
      %p276 = scmp.ne.s32.totalorder %s261, %s275
      %p277 = scmp.eq.s32.totalorder %s48, 0
      %p278 = por %p276, %p277
      %s280 = sadd.s32 %s279, 1
      %p283 = scmp.eq.s32.totalorder %s42, 1
      %p284 = scmp.ne.s32.totalorder %s279, %s281
      %p285 = scmp.eq.s32.totalorder %s42, 0
      %p286 = por %p284, %p285
      %p287 = scmp.ne.s32.totalorder %s279, %s281
      %p288 = scmp.eq.s32.totalorder %s47, 1
      %p289 = por %p287, %p288
      %p290 = scmp.ne.s32.totalorder %s281, %s282
      %p291 = scmp.eq.s32.totalorder %s47, 0
      %p292 = por %p290, %p291
      %p293 = scmp.ne.s32.totalorder %s281, %s282
      %p294 = scmp.eq.s32.totalorder %s48, 1
      %p295 = por %p293, %p294
      %p297 = scmp.ne.s32.totalorder %s282, %s296
      %p298 = scmp.eq.s32.totalorder %s48, 0
      %p299 = por %p297, %p298
      %s301 = sadd.s32 %s300, 1
      %p304 = scmp.eq.s32.totalorder %s42, 1
      %p305 = scmp.ne.s32.totalorder %s300, %s302
      %p306 = scmp.eq.s32.totalorder %s42, 0
      %p307 = por %p305, %p306
      %p308 = scmp.ne.s32.totalorder %s300, %s302
      %p309 = scmp.eq.s32.totalorder %s47, 1
      %p310 = por %p308, %p309
      %p311 = scmp.ne.s32.totalorder %s302, %s303
      %p312 = scmp.eq.s32.totalorder %s47, 0
      %p313 = por %p311, %p312
      %p314 = scmp.ne.s32.totalorder %s302, %s303
      %p315 = scmp.eq.s32.totalorder %s48, 1
      %p316 = por %p314, %p315
      %p318 = scmp.ne.s32.totalorder %s303, %s317
      %p319 = scmp.eq.s32.totalorder %s48, 0
      %p320 = por %p318, %p319
      %s322 = sadd.s32 %s321, 1
      %p325 = scmp.eq.s32.totalorder %s42, 1
      %p326 = scmp.ne.s32.totalorder %s321, %s323
      %p327 = scmp.eq.s32.totalorder %s42, 0
      %p328 = por %p326, %p327
      %p329 = scmp.ne.s32.totalorder %s321, %s323
      %p330 = scmp.eq.s32.totalorder %s47, 1
      %p331 = por %p329, %p330
      %p332 = scmp.ne.s32.totalorder %s323, %s324
      %p333 = scmp.eq.s32.totalorder %s47, 0
      %p334 = por %p332, %p333
      %p335 = scmp.ne.s32.totalorder %s323, %s324
      %p336 = scmp.eq.s32.totalorder %s48, 1
      %p337 = por %p335, %p336
      %p339 = scmp.ne.s32.totalorder %s324, %s338
      %p340 = scmp.eq.s32.totalorder %s48, 0
      %p341 = por %p339, %p340
      %s343 = sadd.s32 %s342, 1
      %p346 = scmp.eq.s32.totalorder %s42, 1
      %p347 = scmp.ne.s32.totalorder %s342, %s344
      %p348 = scmp.eq.s32.totalorder %s42, 0
      %p349 = por %p347, %p348
      %p350 = scmp.ne.s32.totalorder %s342, %s344
      %p351 = scmp.eq.s32.totalorder %s47, 1
      %p352 = por %p350, %p351
      %p353 = scmp.ne.s32.totalorder %s344, %s345
      %p354 = scmp.eq.s32.totalorder %s47, 0
      %p355 = por %p353, %p354
      %p356 = scmp.ne.s32.totalorder %s344, %s345
      %p357 = scmp.eq.s32.totalorder %s48, 1
      %p358 = por %p356, %p357
      %p360 = scmp.ne.s32.totalorder %s345, %s359
      %p361 = scmp.eq.s32.totalorder %s48, 0
      %p362 = por %p360, %p361
      %s364 = sadd.s32 %s363, 1
      %p367 = scmp.eq.s32.totalorder %s42, 1
      %p368 = scmp.ne.s32.totalorder %s363, %s365
      %p369 = scmp.eq.s32.totalorder %s42, 0
      %p370 = por %p368, %p369
      %p371 = scmp.ne.s32.totalorder %s363, %s365
      %p372 = scmp.eq.s32.totalorder %s47, 1
      %p373 = por %p371, %p372
      %p374 = scmp.ne.s32.totalorder %s365, %s366
      %p375 = scmp.eq.s32.totalorder %s47, 0
      %p376 = por %p374, %p375
      %p377 = scmp.ne.s32.totalorder %s365, %s366
      %p378 = scmp.eq.s32.totalorder %s48, 1
      %p379 = por %p377, %p378
      %p381 = scmp.ne.s32.totalorder %s366, %s380
      %p382 = scmp.eq.s32.totalorder %s48, 0
      %p383 = por %p381, %p382
      %s385 = sadd.s32 %s384, 1
      %p388 = scmp.eq.s32.totalorder %s42, 1
      %p389 = scmp.ne.s32.totalorder %s384, %s386
      %p390 = scmp.eq.s32.totalorder %s42, 0
      %p391 = por %p389, %p390
      %p392 = scmp.ne.s32.totalorder %s384, %s386
      %p393 = scmp.eq.s32.totalorder %s47, 1
      %p394 = por %p392, %p393
      %p395 = scmp.ne.s32.totalorder %s386, %s387
      %p396 = scmp.eq.s32.totalorder %s47, 0
      %p397 = por %p395, %p396
      %p398 = scmp.ne.s32.totalorder %s386, %s387
      %p399 = scmp.eq.s32.totalorder %s48, 1
      %p400 = por %p398, %p399
      %p402 = scmp.ne.s32.totalorder %s387, %s401
      %p403 = scmp.eq.s32.totalorder %s48, 0
      %p404 = por %p402, %p403
      %s406 = sadd.s32 %s405, 1
      %p409 = scmp.eq.s32.totalorder %s42, 1
      %p410 = scmp.ne.s32.totalorder %s405, %s407
      %p411 = scmp.eq.s32.totalorder %s42, 0
      %p412 = por %p410, %p411
      %p413 = scmp.ne.s32.totalorder %s405, %s407
      %p414 = scmp.eq.s32.totalorder %s47, 1
      %p415 = por %p413, %p414
      %p416 = scmp.ne.s32.totalorder %s407, %s408
      %p417 = scmp.eq.s32.totalorder %s47, 0
      %p418 = por %p416, %p417
      %p419 = scmp.ne.s32.totalorder %s407, %s408
      %p420 = scmp.eq.s32.totalorder %s48, 1
      %p421 = por %p419, %p420
      %p423 = scmp.ne.s32.totalorder %s408, %s422
      %p424 = scmp.eq.s32.totalorder %s48, 0
      %p425 = por %p423, %p424
      %s427 = sadd.s32 %s426, 1
      %p430 = scmp.eq.s32.totalorder %s42, 1
      %p431 = scmp.ne.s32.totalorder %s426, %s428
      %p432 = scmp.eq.s32.totalorder %s42, 0
      %p433 = por %p431, %p432
      %p434 = scmp.ne.s32.totalorder %s426, %s428
      %p435 = scmp.eq.s32.totalorder %s47, 1
      %p436 = por %p434, %p435
      %p437 = scmp.ne.s32.totalorder %s428, %s429
      %p438 = scmp.eq.s32.totalorder %s47, 0
      %p439 = por %p437, %p438
      %p440 = scmp.ne.s32.totalorder %s428, %s429
      %p441 = scmp.eq.s32.totalorder %s48, 1
      %p442 = por %p440, %p441
      %p444 = scmp.ne.s32.totalorder %s429, %s443
      %p445 = scmp.eq.s32.totalorder %s48, 0
      %p446 = por %p444, %p445
      %s448 = sadd.s32 %s447, 1
      %p451 = scmp.eq.s32.totalorder %s42, 1
      %p452 = scmp.ne.s32.totalorder %s447, %s449
      %p453 = scmp.eq.s32.totalorder %s42, 0
      %p454 = por %p452, %p453
      %p455 = scmp.ne.s32.totalorder %s447, %s449
      %p456 = scmp.eq.s32.totalorder %s47, 1
      %p457 = por %p455, %p456
      %p458 = scmp.ne.s32.totalorder %s449, %s450
      %p459 = scmp.eq.s32.totalorder %s47, 0
      %p460 = por %p458, %p459
      %p461 = scmp.ne.s32.totalorder %s449, %s450
      %p462 = scmp.eq.s32.totalorder %s48, 1
      %p463 = por %p461, %p462
      %p465 = scmp.ne.s32.totalorder %s450, %s464
      %p466 = scmp.eq.s32.totalorder %s48, 0
      %p467 = por %p465, %p466
      %s469 = sadd.s32 %s468, 1
      %p472 = scmp.eq.s32.totalorder %s42, 1
      %p473 = scmp.ne.s32.totalorder %s468, %s470
      %p474 = scmp.eq.s32.totalorder %s42, 0
      %p475 = por %p473, %p474
      %p476 = scmp.ne.s32.totalorder %s468, %s470
      %p477 = scmp.eq.s32.totalorder %s47, 1
      %p478 = por %p476, %p477
      %p479 = scmp.ne.s32.totalorder %s470, %s471
      %p480 = scmp.eq.s32.totalorder %s47, 0
      %p481 = por %p479, %p480
      %p482 = scmp.ne.s32.totalorder %s470, %s471
      %p483 = scmp.eq.s32.totalorder %s48, 1
      %p484 = por %p482, %p483
      %p486 = scmp.ne.s32.totalorder %s471, %s485
      %p487 = scmp.eq.s32.totalorder %s48, 0
      %p488 = por %p486, %p487
      %s490 = sadd.s32 %s489, 1
      %p493 = scmp.eq.s32.totalorder %s42, 1
      %p494 = scmp.ne.s32.totalorder %s489, %s491
      %p495 = scmp.eq.s32.totalorder %s42, 0
      %p496 = por %p494, %p495
      %p497 = scmp.ne.s32.totalorder %s489, %s491
      %p498 = scmp.eq.s32.totalorder %s47, 1
      %p499 = por %p497, %p498
      %p500 = scmp.ne.s32.totalorder %s491, %s492
      %p501 = scmp.eq.s32.totalorder %s47, 0
      %p502 = por %p500, %p501
      %p503 = scmp.ne.s32.totalorder %s491, %s492
      %p504 = scmp.eq.s32.totalorder %s48, 1
      %p505 = por %p503, %p504
      %p507 = scmp.ne.s32.totalorder %s492, %s506
      %p508 = scmp.eq.s32.totalorder %s48, 0
      %p509 = por %p507, %p508
      %s511 = sadd.s32 %s510, 1
      %p514 = scmp.eq.s32.totalorder %s42, 1
      %p515 = scmp.ne.s32.totalorder %s510, %s512
      %p516 = scmp.eq.s32.totalorder %s42, 0
      %p517 = por %p515, %p516
      %p518 = scmp.ne.s32.totalorder %s510, %s512
      %p519 = scmp.eq.s32.totalorder %s47, 1
      %p520 = por %p518, %p519
      %p521 = scmp.ne.s32.totalorder %s512, %s513
      %p522 = scmp.eq.s32.totalorder %s47, 0
      %p523 = por %p521, %p522
      %p524 = scmp.ne.s32.totalorder %s512, %s513
      %p525 = scmp.eq.s32.totalorder %s48, 1
      %p526 = por %p524, %p525
      %p528 = scmp.ne.s32.totalorder %s513, %s527
      %p529 = scmp.eq.s32.totalorder %s48, 0
      %p530 = por %p528, %p529
      %s532 = sadd.s32 %s531, 1
      %p535 = scmp.eq.s32.totalorder %s42, 1
      %p536 = scmp.ne.s32.totalorder %s531, %s533
      %p537 = scmp.eq.s32.totalorder %s42, 0
      %p538 = por %p536, %p537
      %p539 = scmp.ne.s32.totalorder %s531, %s533
      %p540 = scmp.eq.s32.totalorder %s47, 1
      %p541 = por %p539, %p540
      %p542 = scmp.ne.s32.totalorder %s533, %s534
      %p543 = scmp.eq.s32.totalorder %s47, 0
      %p544 = por %p542, %p543
      %p545 = scmp.ne.s32.totalorder %s533, %s534
      %p546 = scmp.eq.s32.totalorder %s48, 1
      %p547 = por %p545, %p546
      %p549 = scmp.ne.s32.totalorder %s534, %s548
      %p550 = scmp.eq.s32.totalorder %s48, 0
      %p551 = por %p549, %p550
      %s553 = sadd.s32 %s552, 1
      %p556 = scmp.eq.s32.totalorder %s42, 1
      %p557 = scmp.ne.s32.totalorder %s552, %s554
      %p558 = scmp.eq.s32.totalorder %s42, 0
      %p559 = por %p557, %p558
      %p560 = scmp.ne.s32.totalorder %s552, %s554
      %p561 = scmp.eq.s32.totalorder %s47, 1
      %p562 = por %p560, %p561
      %p563 = scmp.ne.s32.totalorder %s554, %s555
      %p564 = scmp.eq.s32.totalorder %s47, 0
      %p565 = por %p563, %p564
      %p566 = scmp.ne.s32.totalorder %s554, %s555
      %p567 = scmp.eq.s32.totalorder %s48, 1
      %p568 = por %p566, %p567
      %p570 = scmp.ne.s32.totalorder %s555, %s569
      %p571 = scmp.eq.s32.totalorder %s48, 0
      %p572 = por %p570, %p571
      %s574 = sadd.s32 %s573, 1
      %p577 = scmp.eq.s32.totalorder %s42, 1
      %p578 = scmp.ne.s32.totalorder %s573, %s575
      %p579 = scmp.eq.s32.totalorder %s42, 0
      %p580 = por %p578, %p579
      %p581 = scmp.ne.s32.totalorder %s573, %s575
      %p582 = scmp.eq.s32.totalorder %s47, 1
      %p583 = por %p581, %p582
      %p584 = scmp.ne.s32.totalorder %s575, %s576
      %p585 = scmp.eq.s32.totalorder %s47, 0
      %p586 = por %p584, %p585
      %p587 = scmp.ne.s32.totalorder %s575, %s576
      %p588 = scmp.eq.s32.totalorder %s48, 1
      %p589 = por %p587, %p588
      %p591 = scmp.ne.s32.totalorder %s576, %s590
      %p592 = scmp.eq.s32.totalorder %s48, 0
      %p593 = por %p591, %p592
      %s595 = sadd.s32 %s594, 1
      %p598 = scmp.eq.s32.totalorder %s42, 1
      %p599 = scmp.ne.s32.totalorder %s594, %s596
      %p600 = scmp.eq.s32.totalorder %s42, 0
      %p601 = por %p599, %p600
      %p602 = scmp.ne.s32.totalorder %s594, %s596
      %p603 = scmp.eq.s32.totalorder %s47, 1
      %p604 = por %p602, %p603
      %p605 = scmp.ne.s32.totalorder %s596, %s597
      %p606 = scmp.eq.s32.totalorder %s47, 0
      %p607 = por %p605, %p606
      %p608 = scmp.ne.s32.totalorder %s596, %s597
      %p609 = scmp.eq.s32.totalorder %s48, 1
      %p610 = por %p608, %p609
      %p612 = scmp.ne.s32.totalorder %s597, %s611
      %p613 = scmp.eq.s32.totalorder %s48, 0
      %p614 = por %p612, %p613
      %s616 = sadd.s32 %s615, 1
      %p619 = scmp.eq.s32.totalorder %s42, 1
      %p620 = scmp.ne.s32.totalorder %s615, %s617
      %p621 = scmp.eq.s32.totalorder %s42, 0
      %p622 = por %p620, %p621
      %p623 = scmp.ne.s32.totalorder %s615, %s617
      %p624 = scmp.eq.s32.totalorder %s47, 1
      %p625 = por %p623, %p624
      %p626 = scmp.ne.s32.totalorder %s617, %s618
      %p627 = scmp.eq.s32.totalorder %s47, 0
      %p628 = por %p626, %p627
      %p629 = scmp.ne.s32.totalorder %s617, %s618
      %p630 = scmp.eq.s32.totalorder %s48, 1
      %p631 = por %p629, %p630
      %p633 = scmp.ne.s32.totalorder %s618, %s632
      %p634 = scmp.eq.s32.totalorder %s48, 0
      %p635 = por %p633, %p634
      %p636 = scmp.le.s32.totalorder 1, %s42
      %p637 = scmp.lt.s32.totalorder %s42, 3
      %p638 = pnand %p636, %p637
      %p639 = pneg %p638
      // Predicated region
      $region9: #{tpu_custom_call.1} parent=5 // pred_check
        _
      $region10: #{tpu_custom_call.1} parent=5 // pred_check_branch
        %641 = sbr.rel (%p638) target = $region12
      $region11: #{tpu_custom_call.1} parent=5 // pred_region
        %s642 = ssub.s32 %s42, 1
        // Predicated region
        $region13: #{tpu_custom_call.1} parent=11 // pred_check
          %p643 = pneg %p138
        $region14: #{tpu_custom_call.1} parent=11 // pred_check_branch
          %645 = sbr.rel (%p643) target = $region16
        $region15: #{tpu_custom_call.1} parent=11 // pred_region
          %p646 = scmp.lt.s32.totalorder %s52, 0
          %s647 = scalar_select %p646, %s52, 0
          %s648 = scalar_lea.vmem %s2, %s647
        $region16: #{tpu_custom_call.1} parent=11 // pred_fallthru
          _
        // Predicated region
        $region17: #{tpu_custom_call.1} parent=11 // pred_check
          %p649 = pneg %p187
        $region18: #{tpu_custom_call.1} parent=11 // pred_check_branch
          %651 = sbr.rel (%p649) target = $region20
        $region19: #{tpu_custom_call.1} parent=11 // pred_region
          %s653 = ssub.s32 64, 64
          %654 = vsyncadd [#allocation8], %s653
          %s656 = sshll.u32 [#allocation7], 4
          %s657 = int_to_ptr.vmem [resolvable:$true] %s656
          %659 = dma.hbm_to_vmem [thread:$0]  %s4, 64, %s657, [#allocation8]
        $region20: #{tpu_custom_call.1} parent=11 // pred_fallthru
          _
        // Predicated region
        $region21: #{tpu_custom_call.1} parent=11 // pred_check
          %p660 = pneg %p208
        $region22: #{tpu_custom_call.1} parent=11 // pred_check_branch
          %662 = sbr.rel (%p660) target = $region24
        $region23: #{tpu_custom_call.1} parent=11 // pred_region
          %s664 = ssub.s32 16, 16
          %665 = vsyncadd [#allocation8], %s664
          %s667 = sshll.u32 [#allocation9], 4
          %s668 = int_to_ptr.vmem [resolvable:$true] %s667
          %670 = dma.hbm_to_vmem [thread:$0]  %s5, 16, %s668, [#allocation8]
        $region24: #{tpu_custom_call.1} parent=11 // pred_fallthru
          _
        // Predicated region
        $region25: #{tpu_custom_call.1} parent=11 // pred_check
          %p671 = pneg %p229
        $region26: #{tpu_custom_call.1} parent=11 // pred_check_branch
          %673 = sbr.rel (%p671) target = $region28
        $region27: #{tpu_custom_call.1} parent=11 // pred_region
          _
        $region28: #{tpu_custom_call.1} parent=11 // pred_fallthru
          _
        // Predicated region
        $region29: #{tpu_custom_call.1} parent=11 // pred_check
          %p674 = pneg %p250
        $region30: #{tpu_custom_call.1} parent=11 // pred_check_branch
          %676 = sbr.rel (%p674) target = $region32
        $region31: #{tpu_custom_call.1} parent=11 // pred_region
          %s678 = ssub.s32 16, 16
          %679 = vsyncadd [#allocation11], %s678
          %s681 = sshll.u32 [#allocation10], 4
          %s682 = int_to_ptr.vmem [resolvable:$true] %s681
          %684 = dma.hbm_to_vmem [thread:$0]  %s7, 16, %s682, [#allocation11]
        $region32: #{tpu_custom_call.1} parent=11 // pred_fallthru
          _
        // Predicated region
        $region33: #{tpu_custom_call.1} parent=11 // pred_check
          %p685 = pneg %p271
        $region34: #{tpu_custom_call.1} parent=11 // pred_check_branch
          %687 = sbr.rel (%p685) target = $region36
        $region35: #{tpu_custom_call.1} parent=11 // pred_region
          %s689 = ssub.s32 512, 512
          %690 = vsyncadd [#allocation11], %s689
          %s691 = sshll.u32 [#allocation12], 4
          %s692 = int_to_ptr.vmem [resolvable:$true] %s691
          %697 = dma.hbm_to_vmem [thread:$0]  %s8, 512, %s692, [#allocation11], 128, 128, 8
        $region36: #{tpu_custom_call.1} parent=11 // pred_fallthru
          _
        // Predicated region
        $region37: #{tpu_custom_call.1} parent=11 // pred_check
          %p698 = pneg %p292
        $region38: #{tpu_custom_call.1} parent=11 // pred_check_branch
          %700 = sbr.rel (%p698) target = $region40
        $region39: #{tpu_custom_call.1} parent=11 // pred_region
          %s702 = ssub.s32 16, 16
          %703 = vsyncadd [#allocation14], %s702
          %s705 = sshll.u32 [#allocation13], 4
          %s706 = int_to_ptr.vmem [resolvable:$true] %s705
          %708 = dma.hbm_to_vmem [thread:$0]  %s9, 16, %s706, [#allocation14]
        $region40: #{tpu_custom_call.1} parent=11 // pred_fallthru
          _
        // Predicated region
        $region41: #{tpu_custom_call.1} parent=11 // pred_check
          %p709 = pneg %p313
        $region42: #{tpu_custom_call.1} parent=11 // pred_check_branch
          %711 = sbr.rel (%p709) target = $region44
        $region43: #{tpu_custom_call.1} parent=11 // pred_region
          %s713 = ssub.s32 512, 512
          %714 = vsyncadd [#allocation14], %s713
          %s715 = sshll.u32 [#allocation15], 4
          %s716 = int_to_ptr.vmem [resolvable:$true] %s715
          %721 = dma.hbm_to_vmem [thread:$0]  %s10, 512, %s716, [#allocation14], 128, 128, 8
        $region44: #{tpu_custom_call.1} parent=11 // pred_fallthru
          _
        // Predicated region
        $region45: #{tpu_custom_call.1} parent=11 // pred_check
          %p722 = pneg %p334
        $region46: #{tpu_custom_call.1} parent=11 // pred_check_branch
          %724 = sbr.rel (%p722) target = $region48
        $region47: #{tpu_custom_call.1} parent=11 // pred_region
          %s726 = ssub.s32 16, 16
          %727 = vsyncadd [#allocation17], %s726
          %s729 = sshll.u32 [#allocation16], 4
          %s730 = int_to_ptr.vmem [resolvable:$true] %s729
          %732 = dma.hbm_to_vmem [thread:$0]  %s11, 16, %s730, [#allocation17]
        $region48: #{tpu_custom_call.1} parent=11 // pred_fallthru
          _
        // Predicated region
        $region49: #{tpu_custom_call.1} parent=11 // pred_check
          %p733 = pneg %p355
        $region50: #{tpu_custom_call.1} parent=11 // pred_check_branch
          %735 = sbr.rel (%p733) target = $region52
        $region51: #{tpu_custom_call.1} parent=11 // pred_region
          %s737 = ssub.s32 64, 64
          %738 = vsyncadd [#allocation17], %s737
          %s740 = sshll.u32 [#allocation18], 4
          %s741 = int_to_ptr.vmem [resolvable:$true] %s740
          %743 = dma.hbm_to_vmem [thread:$0]  %s12, 64, %s741, [#allocation17]
        $region52: #{tpu_custom_call.1} parent=11 // pred_fallthru
          _
        // Predicated region
        $region53: #{tpu_custom_call.1} parent=11 // pred_check
          %p744 = pneg %p376
        $region54: #{tpu_custom_call.1} parent=11 // pred_check_branch
          %746 = sbr.rel (%p744) target = $region56
        $region55: #{tpu_custom_call.1} parent=11 // pred_region
          %s748 = ssub.s32 512, 512
          %749 = vsyncadd [#allocation20], %s748
          %s750 = sshll.u32 [#allocation19], 4
          %s751 = int_to_ptr.vmem [resolvable:$true] %s750
          %756 = dma.hbm_to_vmem [thread:$0]  %s13, 512, %s751, [#allocation20], 128, 128, 8
        $region56: #{tpu_custom_call.1} parent=11 // pred_fallthru
          _
        // Predicated region
        $region57: #{tpu_custom_call.1} parent=11 // pred_check
          %p757 = pneg %p397
        $region58: #{tpu_custom_call.1} parent=11 // pred_check_branch
          %759 = sbr.rel (%p757) target = $region60
        $region59: #{tpu_custom_call.1} parent=11 // pred_region
          %s761 = ssub.s32 16, 16
          %762 = vsyncadd [#allocation20], %s761
          %s764 = sshll.u32 [#allocation21], 4
          %s765 = int_to_ptr.vmem [resolvable:$true] %s764
          %767 = dma.hbm_to_vmem [thread:$0]  %s14, 16, %s765, [#allocation20]
        $region60: #{tpu_custom_call.1} parent=11 // pred_fallthru
          _
        // Predicated region
        $region61: #{tpu_custom_call.1} parent=11 // pred_check
          %p768 = pneg %p418
        $region62: #{tpu_custom_call.1} parent=11 // pred_check_branch
          %770 = sbr.rel (%p768) target = $region64
        $region63: #{tpu_custom_call.1} parent=11 // pred_region
          _
        $region64: #{tpu_custom_call.1} parent=11 // pred_fallthru
          _
        // Predicated region
        $region65: #{tpu_custom_call.1} parent=11 // pred_check
          %p771 = pneg %p439
        $region66: #{tpu_custom_call.1} parent=11 // pred_check_branch
          %773 = sbr.rel (%p771) target = $region68
        $region67: #{tpu_custom_call.1} parent=11 // pred_region
          _
        $region68: #{tpu_custom_call.1} parent=11 // pred_fallthru
          _
        // Predicated region
        $region69: #{tpu_custom_call.1} parent=11 // pred_check
          %p774 = pneg %p460
        $region70: #{tpu_custom_call.1} parent=11 // pred_check_branch
          %776 = sbr.rel (%p774) target = $region72
        $region71: #{tpu_custom_call.1} parent=11 // pred_region
          %s778 = ssub.s32 512, 512
          %779 = vsyncadd [#allocation23], %s778
          %s780 = sshll.u32 [#allocation22], 4
          %s781 = int_to_ptr.vmem [resolvable:$true] %s780
          %786 = dma.hbm_to_vmem [thread:$0]  %s17, 512, %s781, [#allocation23], 128, 128, 8
        $region72: #{tpu_custom_call.1} parent=11 // pred_fallthru
          _
        // Predicated region
        $region73: #{tpu_custom_call.1} parent=11 // pred_check
          %p787 = pneg %p481
        $region74: #{tpu_custom_call.1} parent=11 // pred_check_branch
          %789 = sbr.rel (%p787) target = $region76
        $region75: #{tpu_custom_call.1} parent=11 // pred_region
          _
        $region76: #{tpu_custom_call.1} parent=11 // pred_fallthru
          _
        // Predicated region
        $region77: #{tpu_custom_call.1} parent=11 // pred_check
          %p790 = pneg %p502
        $region78: #{tpu_custom_call.1} parent=11 // pred_check_branch
          %792 = sbr.rel (%p790) target = $region80
        $region79: #{tpu_custom_call.1} parent=11 // pred_region
          %s794 = ssub.s32 512, 512
          %795 = vsyncadd [#allocation23], %s794
          %s796 = sshll.u32 [#allocation24], 4
          %s797 = int_to_ptr.vmem [resolvable:$true] %s796
          %802 = dma.hbm_to_vmem [thread:$0]  %s19, 512, %s797, [#allocation23], 128, 128, 8
        $region80: #{tpu_custom_call.1} parent=11 // pred_fallthru
          _
        // Predicated region
        $region81: #{tpu_custom_call.1} parent=11 // pred_check
          %p803 = pneg %p523
        $region82: #{tpu_custom_call.1} parent=11 // pred_check_branch
          %805 = sbr.rel (%p803) target = $region84
        $region83: #{tpu_custom_call.1} parent=11 // pred_region
          _
        $region84: #{tpu_custom_call.1} parent=11 // pred_fallthru
          _
        // Predicated region
        $region85: #{tpu_custom_call.1} parent=11 // pred_check
          %p806 = pneg %p544
        $region86: #{tpu_custom_call.1} parent=11 // pred_check_branch
          %808 = sbr.rel (%p806) target = $region88
        $region87: #{tpu_custom_call.1} parent=11 // pred_region
          %s810 = ssub.s32 512, 512
          %811 = vsyncadd [#allocation26], %s810
          %s812 = sshll.u32 [#allocation25], 4
          %s813 = int_to_ptr.vmem [resolvable:$true] %s812
          %818 = dma.hbm_to_vmem [thread:$0]  %s21, 512, %s813, [#allocation26], 128, 128, 8
        $region88: #{tpu_custom_call.1} parent=11 // pred_fallthru
          _
        // Predicated region
        $region89: #{tpu_custom_call.1} parent=11 // pred_check
          %p819 = pneg %p565
        $region90: #{tpu_custom_call.1} parent=11 // pred_check_branch
          %821 = sbr.rel (%p819) target = $region92
        $region91: #{tpu_custom_call.1} parent=11 // pred_region
          _
        $region92: #{tpu_custom_call.1} parent=11 // pred_fallthru
          _
        // Predicated region
        $region93: #{tpu_custom_call.1} parent=11 // pred_check
          %p822 = pneg %p586
        $region94: #{tpu_custom_call.1} parent=11 // pred_check_branch
          %824 = sbr.rel (%p822) target = $region96
        $region95: #{tpu_custom_call.1} parent=11 // pred_region
          %s826 = ssub.s32 512, 512
          %827 = vsyncadd [#allocation26], %s826
          %s828 = sshll.u32 [#allocation27], 4
          %s829 = int_to_ptr.vmem [resolvable:$true] %s828
          %834 = dma.hbm_to_vmem [thread:$0]  %s23, 512, %s829, [#allocation26], 128, 128, 8
        $region96: #{tpu_custom_call.1} parent=11 // pred_fallthru
          _
        // Predicated region
        $region97: #{tpu_custom_call.1} parent=11 // pred_check
          %p835 = pneg %p607
        $region98: #{tpu_custom_call.1} parent=11 // pred_check_branch
          %837 = sbr.rel (%p835) target = $region100
        $region99: #{tpu_custom_call.1} parent=11 // pred_region
          _
        $region100: #{tpu_custom_call.1} parent=11 // pred_fallthru
          _
      $region12: #{tpu_custom_call.1} parent=5 // pred_fallthru
        _
      %p838 = scmp.lt.s32.totalorder %s42, 2
      // Predicated region
      $region101: #{tpu_custom_call.1} parent=5 // pred_check
        %p839 = pneg %p838
      $region102: #{tpu_custom_call.1} parent=5 // pred_check_branch
        %841 = sbr.rel (%p839) target = $region104
      $region103: #{tpu_custom_call.1} parent=5 // pred_region
        // Predicated region
        $region105: #{tpu_custom_call.1} parent=103 // pred_check
          %p842 = pneg %p78
        $region106: #{tpu_custom_call.1} parent=103 // pred_check_branch
          %844 = sbr.rel (%p842) target = $region108
        $region107: #{tpu_custom_call.1} parent=103 // pred_region
          %s845 = ssub.s32 1, %s49
          %s846 = smul.u32 %s845, %s50
          %s847 = smul.u32 2, %s846
          %p848 = scmp.lt.s32.totalorder %s847, 1
          %s849 = scalar_select %p848, %s847, 1
          %s850 = smul.addr %s849, 8
          %s851 = scalar_lea.vmem %s0, %s850
          %s852 = ssub.s32 1, %s49
          %s853 = smul.u32 %s852, %s50
          %s854 = smul.u32 2, %s853
        $region108: #{tpu_custom_call.1} parent=103 // pred_fallthru
          _
        // Predicated region
        $region109: #{tpu_custom_call.1} parent=103 // pred_check
          %p855 = pneg %p106
        $region110: #{tpu_custom_call.1} parent=103 // pred_check_branch
          %857 = sbr.rel (%p855) target = $region112
        $region111: #{tpu_custom_call.1} parent=103 // pred_region
          %s858 = smul.u32 %s49, %s50
          %s859 = smul.u32 2, %s858
          %p860 = scmp.lt.s32.totalorder %s859, 1
          %s861 = scalar_select %p860, %s859, 1
          %s862 = smul.addr %s861, 8
          %s863 = scalar_lea.vmem %s1, %s862
          %s864 = smul.u32 %s49, %s50
          %s865 = smul.u32 2, %s864
        $region112: #{tpu_custom_call.1} parent=103 // pred_fallthru
          _
        // Predicated region
        $region113: #{tpu_custom_call.1} parent=103 // pred_check
          %p866 = pneg %p160
        $region114: #{tpu_custom_call.1} parent=103 // pred_check_branch
          %868 = sbr.rel (%p866) target = $region116
        $region115: #{tpu_custom_call.1} parent=103 // pred_region
          %s869 = sand.u32 %s150, 1
          %s870 = scalar_lea.sflag [#allocation5], %s869
          %s871 = sand.u32 %s150, 1
          %s872 = scalar_lea.vmem [#allocation4], %s871
          %s873 = smul.u32 %s49, %s50
          %s875 = ssub.s32 16, 16
          %876 = vsyncadd %s870, %s875
          %s877 = smul.addr %s873, 16
          %s878 = scalar_lea.hbm %s3, %s877
          %s880 = sshll.u32 %s872, 4
          %s881 = int_to_ptr.vmem [resolvable:$true] %s880
          %883 = dma.hbm_to_vmem [thread:$0]  %s878, 16, %s881, %s870
        $region116: #{tpu_custom_call.1} parent=103 // pred_fallthru
          _
      $region104: #{tpu_custom_call.1} parent=5 // pred_fallthru
        _
      %p884 = scmp.le.s32.totalorder 1, %s42
      %p885 = scmp.lt.s32.totalorder %s42, 3
      %p886 = pnand %p884, %p885
      %p887 = pneg %p886
      // Predicated region
      $region117: #{tpu_custom_call.1} parent=5 // pred_check
        _
      $region118: #{tpu_custom_call.1} parent=5 // pred_check_branch
        %889 = sbr.rel (%p886) target = $region120
      $region119: #{tpu_custom_call.1} parent=5 // pred_region
        %s890 = ssub.s32 %s42, 1
        %s891 = sand.u32 %s153, 1
        %s892 = scalar_lea.sflag [#allocation5], %s891
        %s893 = sand.u32 %s153, 1
        %s894 = scalar_lea.vmem [#allocation4], %s893
        // Predicated region
        $region121: #{tpu_custom_call.1} parent=119 // pred_check
          %p895 = pneg %p166
        $region122: #{tpu_custom_call.1} parent=119 // pred_check_branch
          %897 = sbr.rel (%p895) target = $region124
        $region123: #{tpu_custom_call.1} parent=119 // pred_region
          %898 = dma.done %s892, 16
        $region124: #{tpu_custom_call.1} parent=119 // pred_fallthru
          _
        // Predicated region
        $region125: #{tpu_custom_call.1} parent=119 // pred_check
          %p899 = pneg %p187
        $region126: #{tpu_custom_call.1} parent=119 // pred_check_branch
          %901 = sbr.rel (%p899) target = $region128
        $region127: #{tpu_custom_call.1} parent=119 // pred_region
          %902 = dma.done [#allocation8], 64
        $region128: #{tpu_custom_call.1} parent=119 // pred_fallthru
          _
        // Predicated region
        $region129: #{tpu_custom_call.1} parent=119 // pred_check
          %p903 = pneg %p208
        $region130: #{tpu_custom_call.1} parent=119 // pred_check_branch
          %905 = sbr.rel (%p903) target = $region132
        $region131: #{tpu_custom_call.1} parent=119 // pred_region
          %906 = dma.done [#allocation8], 16
        $region132: #{tpu_custom_call.1} parent=119 // pred_fallthru
          _
        // Predicated region
        $region133: #{tpu_custom_call.1} parent=119 // pred_check
          %p907 = pneg %p250
        $region134: #{tpu_custom_call.1} parent=119 // pred_check_branch
          %909 = sbr.rel (%p907) target = $region136
        $region135: #{tpu_custom_call.1} parent=119 // pred_region
          %910 = dma.done [#allocation11], 16
        $region136: #{tpu_custom_call.1} parent=119 // pred_fallthru
          _
        // Predicated region
        $region137: #{tpu_custom_call.1} parent=119 // pred_check
          %p911 = pneg %p271
        $region138: #{tpu_custom_call.1} parent=119 // pred_check_branch
          %913 = sbr.rel (%p911) target = $region140
        $region139: #{tpu_custom_call.1} parent=119 // pred_region
          %914 = dma.done [#allocation11], 512
        $region140: #{tpu_custom_call.1} parent=119 // pred_fallthru
          _
        // Predicated region
        $region141: #{tpu_custom_call.1} parent=119 // pred_check
          %p915 = pneg %p292
        $region142: #{tpu_custom_call.1} parent=119 // pred_check_branch
          %917 = sbr.rel (%p915) target = $region144
        $region143: #{tpu_custom_call.1} parent=119 // pred_region
          %918 = dma.done [#allocation14], 16
        $region144: #{tpu_custom_call.1} parent=119 // pred_fallthru
          _
        // Predicated region
        $region145: #{tpu_custom_call.1} parent=119 // pred_check
          %p919 = pneg %p313
        $region146: #{tpu_custom_call.1} parent=119 // pred_check_branch
          %921 = sbr.rel (%p919) target = $region148
        $region147: #{tpu_custom_call.1} parent=119 // pred_region
          %922 = dma.done [#allocation14], 512
        $region148: #{tpu_custom_call.1} parent=119 // pred_fallthru
          _
        // Predicated region
        $region149: #{tpu_custom_call.1} parent=119 // pred_check
          %p923 = pneg %p334
        $region150: #{tpu_custom_call.1} parent=119 // pred_check_branch
          %925 = sbr.rel (%p923) target = $region152
        $region151: #{tpu_custom_call.1} parent=119 // pred_region
          %926 = dma.done [#allocation17], 16
        $region152: #{tpu_custom_call.1} parent=119 // pred_fallthru
          _
        // Predicated region
        $region153: #{tpu_custom_call.1} parent=119 // pred_check
          %p927 = pneg %p355
        $region154: #{tpu_custom_call.1} parent=119 // pred_check_branch
          %929 = sbr.rel (%p927) target = $region156
        $region155: #{tpu_custom_call.1} parent=119 // pred_region
          %930 = dma.done [#allocation17], 64
        $region156: #{tpu_custom_call.1} parent=119 // pred_fallthru
          _
        // Predicated region
        $region157: #{tpu_custom_call.1} parent=119 // pred_check
          %p931 = pneg %p376
        $region158: #{tpu_custom_call.1} parent=119 // pred_check_branch
          %933 = sbr.rel (%p931) target = $region160
        $region159: #{tpu_custom_call.1} parent=119 // pred_region
          %934 = dma.done [#allocation20], 512
        $region160: #{tpu_custom_call.1} parent=119 // pred_fallthru
          _
        // Predicated region
        $region161: #{tpu_custom_call.1} parent=119 // pred_check
          %p935 = pneg %p397
        $region162: #{tpu_custom_call.1} parent=119 // pred_check_branch
          %937 = sbr.rel (%p935) target = $region164
        $region163: #{tpu_custom_call.1} parent=119 // pred_region
          %938 = dma.done [#allocation20], 16
        $region164: #{tpu_custom_call.1} parent=119 // pred_fallthru
          _
        // Predicated region
        $region165: #{tpu_custom_call.1} parent=119 // pred_check
          %p939 = pneg %p460
        $region166: #{tpu_custom_call.1} parent=119 // pred_check_branch
          %941 = sbr.rel (%p939) target = $region168
        $region167: #{tpu_custom_call.1} parent=119 // pred_region
          %942 = dma.done [#allocation23], 512
        $region168: #{tpu_custom_call.1} parent=119 // pred_fallthru
          _
        // Predicated region
        $region169: #{tpu_custom_call.1} parent=119 // pred_check
          %p943 = pneg %p502
        $region170: #{tpu_custom_call.1} parent=119 // pred_check_branch
          %945 = sbr.rel (%p943) target = $region172
        $region171: #{tpu_custom_call.1} parent=119 // pred_region
          %946 = dma.done [#allocation23], 512
        $region172: #{tpu_custom_call.1} parent=119 // pred_fallthru
          _
        // Predicated region
        $region173: #{tpu_custom_call.1} parent=119 // pred_check
          %p947 = pneg %p544
        $region174: #{tpu_custom_call.1} parent=119 // pred_check_branch
          %949 = sbr.rel (%p947) target = $region176
        $region175: #{tpu_custom_call.1} parent=119 // pred_region
          %950 = dma.done [#allocation26], 512
        $region176: #{tpu_custom_call.1} parent=119 // pred_fallthru
          _
        // Predicated region
        $region177: #{tpu_custom_call.1} parent=119 // pred_check
          %p951 = pneg %p586
        $region178: #{tpu_custom_call.1} parent=119 // pred_check_branch
          %953 = sbr.rel (%p951) target = $region180
        $region179: #{tpu_custom_call.1} parent=119 // pred_region
          %954 = dma.done [#allocation26], 512
        $region180: #{tpu_custom_call.1} parent=119 // pred_fallthru
          _
        %s955 = ssub.s32 1, %s51
        %s956 = smul.u32 %s955, %s52
        %s957 = smul.u32 2, %s956
        %p958 = scmp.lt.s32.totalorder %s957, 1
        %s959 = scalar_select %p958, %s957, 1
        %s960 = smul.addr %s959, 8
        %s961 = scalar_lea.vmem %s0, %s960
        %p962 = pneg %p84
        %p963 = pneg %p81
        %s964 = smul.u32 %s51, %s52
        %s965 = smul.u32 2, %s964
        %p966 = scmp.lt.s32.totalorder %s965, 1
        %s967 = scalar_select %p966, %s965, 1
        %s968 = smul.addr %s967, 8
        %s969 = scalar_lea.vmem %s1, %s968
        %p970 = pneg %p112
        %p971 = pneg %p109
        %p972 = scmp.lt.s32.totalorder %s52, 0
        %s973 = scalar_select %p972, %s52, 0
        %s974 = scalar_lea.vmem %s2, %s973
        %p975 = pneg %p138
        %p976 = pneg %p135
        %s977 = sand.u32 %s153, 1
        %s978 = scalar_lea.sflag [#allocation5], %s977
        %s979 = sand.u32 %s153, 1
        %s980 = scalar_lea.vmem [#allocation4], %s979
        %p981 = pneg %p166
        %p982 = pneg %p163
        %p983 = pneg %p187
        %p984 = pneg %p184
        %p985 = pneg %p208
        %p986 = pneg %p205
        %p987 = pneg %p229
        %p988 = pneg %p226
        %p989 = pneg %p250
        %p990 = pneg %p247
        %p991 = pneg %p271
        %p992 = pneg %p268
        %p993 = pneg %p292
        %p994 = pneg %p289
        %p995 = pneg %p313
        %p996 = pneg %p310
        %p997 = pneg %p334
        %p998 = pneg %p331
        %p999 = pneg %p355
        %p1000 = pneg %p352
        %p1001 = pneg %p376
        %p1002 = pneg %p373
        %p1003 = pneg %p397
        %p1004 = pneg %p394
        %p1005 = pneg %p418
        %p1006 = pneg %p415
        %p1007 = pneg %p439
        %p1008 = pneg %p436
        %p1009 = pneg %p460
        %p1010 = pneg %p457
        %p1011 = pneg %p481
        %p1012 = pneg %p478
        %p1013 = pneg %p502
        %p1014 = pneg %p499
        %p1015 = pneg %p523
        %p1016 = pneg %p520
        %p1017 = pneg %p544
        %p1018 = pneg %p541
        %p1019 = pneg %p565
        %p1020 = pneg %p562
        %p1021 = pneg %p586
        %p1022 = pneg %p583
        %p1023 = pneg %p607
        %p1024 = pneg %p604
        %p1025 = pneg %p628
        %p1026 = pneg %p625
        %s1027 = ssub.s32 1, %s51
        %s1028 = smul.u32 %s1027, %s52
        %s1029 = smul.u32 2, %s1028
        %p1030 = scmp.lt.s32.totalorder %s1029, 1
        %s1031 = scalar_select %p1030, %s1029, 1
        %s1032 = smul.addr %s1031, 8
        %s1033 = scalar_lea.vmem %s0, %s1032
        %s1034 = ssub.s32 1, %s51
        %s1035 = smul.u32 %s1034, %s52
        %s1036 = smul.u32 2, %s1035
        %s1037 = smul.u32 %s51, %s52
        %s1038 = smul.u32 2, %s1037
        %p1039 = scmp.lt.s32.totalorder %s1038, 1
        %s1040 = scalar_select %p1039, %s1038, 1
        %s1041 = smul.addr %s1040, 8
        %s1042 = scalar_lea.vmem %s1, %s1041
        %s1043 = smul.u32 %s51, %s52
        %s1044 = smul.u32 2, %s1043
        %p1045 = scmp.lt.s32.totalorder %s52, 0
        %s1046 = scalar_select %p1045, %s52, 0
        %s1047 = scalar_lea.vmem %s2, %s1046
        %s1048 = smul.u32 %s51, %s52
        %p1049 = scmp.eq.s32.totalorder %s52, 0
        // Predicated region
        $region181: #{tpu_custom_call.1} parent=119 // pred_check
          %p1050 = pneg %p1049
        $region182: #{tpu_custom_call.1} parent=119 // pred_check_branch
          %1052 = sbr.rel (%p1050) target = $region184
        $region183: #{tpu_custom_call.1} parent=119 // pred_region
          %vm1053 = vcmask 254976
          %1054 = vst.msk [vmem:[#allocation2] sm:$0x3] %vm1053, 0.0
        $region184: #{tpu_custom_call.1} parent=119 // pred_fallthru
          _
        %v1055 = vld [vmem:[%s1047] sm:$0x1]
        %v1056 = vlaneseq
        %v1057 = vshrl.u32 %v1056, 7
        %v1058 = vlaneseq
        %v1059 = vshrl.u32 %v1058, 7
        %v1060 = vsub.s32 0, %v1059
        %v1061 = vrot.slane %v1055, %v1060
        %vm1062 = vcmp.eq.s32.totalorder %v1057, %v1061
        %v1063 = vsel %vm1062, 1, 0
        %v1064 = vcvt.s32.f32 %v1063
        %p1065 = scmp.eq.s32.totalorder %s51, 0
        // Predicated region
        $region185: #{tpu_custom_call.1} parent=119 // pred_check
          %p1066 = pneg %p1065
        $region186: #{tpu_custom_call.1} parent=119 // pred_check_branch
          %1068 = sbr.rel (%p1066) target = $region188
        $region187: #{tpu_custom_call.1} parent=119 // pred_region
          %v1069 = vld [vmem:[%s1033] sm:$0xff]
          %v1070 = vld [vmem:[%s1033 + $0x8] sm:$0xff]
          %v1071 = vld [vmem:[#allocation7] sm:$0xf]
          %v1072 = vld [vmem:[#allocation9] sm:$0x1]
          %v1074 = vlaneseq
          %v1075 = vshrl.u32 %v1074, 7
          %v1076 = vsub.s32 0, %v1075
          %v1077 = vrot.slane %v1072, %v1076
          %vm1079 = vcmask 31744
          %v1081 = vsel %vm1079, %v1069, 0
          %v1084 = vsel %vm1079, %v1070, 0
          %vm1086 = vcmask 1043456
          %v1088 = vsel %vm1086, %v1071, 0
          %1090 = vmatprep.subr.mxu0 0.0
          %1091 = vmatpush1.msra.mxu0 0.0
          %1092 = vmatprep.subr.mxu0 0.0
          %1093 = vmatpush1.msra.mxu0 0.0
          %1094 = vmatprep.subr.mxu0 0.0
          %1095 = vmatpush1.msra.mxu0 0.0
          %1096 = vmatprep.subr.mxu0 0.0
          %1097 = vmatpush1.msra.mxu0 0.0
          %1098 = vmatprep.subr.mxu0 0.0
          %1099 = vmatpush1.msra.mxu0 0.0
          %1100 = vmatprep.subr.mxu0 0.0
          %1101 = vmatpush1.msra.mxu0 0.0
          %1102 = vmatprep.subr.mxu0 0.0
          %1103 = vmatpush1.msra.mxu0 0.0
          %1104 = vmatprep.subr.mxu0 0.0
          %1105 = vmatpush1.msra.mxu0 0.0
          %1106 = vmatprep.subr.mxu0 0.0
          %1107 = vmatpush1.msra.mxu0 0.0
          %1108 = vmatprep.subr.mxu0 0.0
          %1109 = vmatpush1.msra.mxu0 0.0
          %1110 = vmatprep.subr.mxu0 0.0
          %1111 = vmatpush1.msra.mxu0 0.0
          %1112 = vmatprep.subr.mxu0 0.0
          %1113 = vmatpush1.msra.mxu0 0.0
          %1114 = vmatprep.subr.mxu0 0.0
          %1115 = vmatpush1.msra.mxu0 0.0
          %1116 = vmatprep.subr.mxu0 0.0
          %1117 = vmatpush1.msra.mxu0 0.0
          %1118 = vmatprep.subr.mxu0 0.0
          %1119 = vmatpush1.msra.mxu0 0.0
          %1120 = vmatprep.subr.mxu0 0.0
          %1121 = vmatpush1.msra.mxu0 %v1088
          %1122 = vmatprep.subr.mxu0 0.0
          %1123 = vmatpush2.msra.mxu0 0.0
          %1124 = vmatprep.subr.mxu0 0.0
          %1125 = vmatpush2.msra.mxu0 0.0
          %1126 = vmatprep.subr.mxu0 0.0
          %1127 = vmatpush2.msra.mxu0 0.0
          %1128 = vmatprep.subr.mxu0 0.0
          %1129 = vmatpush2.msra.mxu0 0.0
          %1130 = vmatprep.subr.mxu0 0.0
          %1131 = vmatpush2.msra.mxu0 0.0
          %1132 = vmatprep.subr.mxu0 0.0
          %1133 = vmatpush2.msra.mxu0 0.0
          %1134 = vmatprep.subr.mxu0 0.0
          %1135 = vmatpush2.msra.mxu0 0.0
          %1136 = vmatprep.subr.mxu0 0.0
          %1137 = vmatpush2.msra.mxu0 0.0
          %1138 = vmatprep.subr.mxu0 0.0
          %1139 = vmatpush2.msra.mxu0 0.0
          %1140 = vmatprep.subr.mxu0 0.0
          %1141 = vmatpush2.msra.mxu0 0.0
          %1142 = vmatprep.subr.mxu0 0.0
          %1143 = vmatpush2.msra.mxu0 0.0
          %1144 = vmatprep.subr.mxu0 0.0
          %1145 = vmatpush2.msra.mxu0 0.0
          %1146 = vmatprep.subr.mxu0 0.0
          %1147 = vmatpush2.msra.mxu0 0.0
          %1148 = vmatprep.subr.mxu0 0.0
          %1149 = vmatpush2.msra.mxu0 0.0
          %1150 = vmatprep.subr.mxu0 0.0
          %1151 = vmatpush2.msra.mxu0 0.0
          %1152 = vmatprep.subr.mxu0 0.0
          %1153 = vmatpush2.msra.mxu0 0.0
          %1154 = vmatprep.mubr.f32.mxu0 0.0
          %1155 = vmatmul.mubr.f32.gmra.mxu0 %v1081
          %v1156 = vpop.f32.mrf.mxu0
          %v1157 = vadd.f32 %v1077, %v1156
          %v1158 = vpop.f32.mrf.mxu0
          %1159 = vmatprep.mubr.f32.mxu0 0.0
          %1160 = vmatmul.mubr.f32.gmra.mxu0 %v1084
          %v1161 = vpop.f32.mrf.mxu0
          %v1162 = vadd.f32 %v1077, %v1161
          %v1163 = vpop.f32.mrf.mxu0
          %1164 = vdwg.mxu0
          %v1165 = vmax.f32 %v1157, 0.0
          %v1166 = vmax.f32 %v1162, 0.0
          %v1167 = vld [vmem:[%s6] sm:$0xff]
          %v1168 = vld [vmem:[%s6 + $0x8] sm:$0xff]
          %v1169 = vld [vmem:[%s6 + $0x10] sm:$0xff]
          %v1170 = vld [vmem:[%s6 + $0x18] sm:$0xff]
          %v1171 = vld [vmem:[#allocation10] sm:$0x1]
          %v1173 = vlaneseq
          %v1174 = vshrl.u32 %v1173, 7
          %v1175 = vsub.s32 0, %v1174
          %v1176 = vrot.slane %v1171, %v1175
          %vm1178 = vcmask 261120
          %v1180 = vsel %vm1178, %v1165, 0
          %v1183 = vsel %vm1178, %v1166, 0
          %1185 = vmatprep.subr.mxu0 0.0
          %1186 = vmatpush1.msra.mxu0 0.0
          %1187 = vmatprep.subr.mxu0 0.0
          %1188 = vmatpush1.msra.mxu0 0.0
          %1189 = vmatprep.subr.mxu0 0.0
          %1190 = vmatpush1.msra.mxu0 0.0
          %1191 = vmatprep.subr.mxu0 0.0
          %1192 = vmatpush1.msra.mxu0 0.0
          %1193 = vmatprep.subr.mxu0 0.0
          %1194 = vmatpush1.msra.mxu0 0.0
          %1195 = vmatprep.subr.mxu0 0.0
          %1196 = vmatpush1.msra.mxu0 0.0
          %1197 = vmatprep.subr.mxu0 0.0
          %1198 = vmatpush1.msra.mxu0 0.0
          %1199 = vmatprep.subr.mxu0 0.0
          %1200 = vmatpush1.msra.mxu0 0.0
          %1201 = vmatprep.subr.mxu0 0.0
          %1202 = vmatpush1.msra.mxu0 0.0
          %1203 = vmatprep.subr.mxu0 0.0
          %1204 = vmatpush1.msra.mxu0 0.0
          %1205 = vmatprep.subr.mxu0 0.0
          %1206 = vmatpush1.msra.mxu0 0.0
          %1207 = vmatprep.subr.mxu0 0.0
          %1208 = vmatpush1.msra.mxu0 0.0
          %1209 = vmatprep.subr.mxu0 0.0
          %1210 = vmatpush1.msra.mxu0 %v1170
          %1211 = vmatprep.subr.mxu0 0.0
          %1212 = vmatpush1.msra.mxu0 %v1169
          %1213 = vmatprep.subr.mxu0 0.0
          %1214 = vmatpush1.msra.mxu0 %v1168
          %1215 = vmatprep.subr.mxu0 0.0
          %1216 = vmatpush1.msra.mxu0 %v1167
          %1217 = vmatprep.subr.mxu0 0.0
          %1218 = vmatpush2.msra.mxu0 0.0
          %1219 = vmatprep.subr.mxu0 0.0
          %1220 = vmatpush2.msra.mxu0 0.0
          %1221 = vmatprep.subr.mxu0 0.0
          %1222 = vmatpush2.msra.mxu0 0.0
          %1223 = vmatprep.subr.mxu0 0.0
          %1224 = vmatpush2.msra.mxu0 0.0
          %1225 = vmatprep.subr.mxu0 0.0
          %1226 = vmatpush2.msra.mxu0 0.0
          %1227 = vmatprep.subr.mxu0 0.0
          %1228 = vmatpush2.msra.mxu0 0.0
          %1229 = vmatprep.subr.mxu0 0.0
          %1230 = vmatpush2.msra.mxu0 0.0
          %1231 = vmatprep.subr.mxu0 0.0
          %1232 = vmatpush2.msra.mxu0 0.0
          %1233 = vmatprep.subr.mxu0 0.0
          %1234 = vmatpush2.msra.mxu0 0.0
          %1235 = vmatprep.subr.mxu0 0.0
          %1236 = vmatpush2.msra.mxu0 0.0
          %1237 = vmatprep.subr.mxu0 0.0
          %1238 = vmatpush2.msra.mxu0 0.0
          %1239 = vmatprep.subr.mxu0 0.0
          %1240 = vmatpush2.msra.mxu0 0.0
          %1241 = vmatprep.subr.mxu0 0.0
          %1242 = vmatpush2.msra.mxu0 0.0
          %1243 = vmatprep.subr.mxu0 0.0
          %1244 = vmatpush2.msra.mxu0 0.0
          %1245 = vmatprep.subr.mxu0 0.0
          %1246 = vmatpush2.msra.mxu0 0.0
          %1247 = vmatprep.subr.mxu0 0.0
          %1248 = vmatpush2.msra.mxu0 0.0
          %1249 = vmatprep.mubr.f32.mxu0 0.0
          %1250 = vmatmul.mubr.f32.gmra.mxu0 %v1180
          %v1251 = vpop.f32.mrf.mxu0
          %v1252 = vadd.f32 %v1176, %v1251
          %v1253 = vpop.f32.mrf.mxu0
          %1254 = vmatprep.mubr.f32.mxu0 0.0
          %1255 = vmatmul.mubr.f32.gmra.mxu0 %v1183
          %v1256 = vpop.f32.mrf.mxu0
          %v1257 = vadd.f32 %v1176, %v1256
          %v1258 = vpop.f32.mrf.mxu0
          %1259 = vdwg.mxu0
          %v1260 = vld [vmem:[#allocation2] sm:$0x3]
          %vm1261 = vcmask 130048
          %v1263 = vsel %vm1261, %v1064, 0
          %1265 = vmatprep.subr.mxu0 0.0
          %1266 = vmatpush1.msra.mxu0 0.0
          %1267 = vmatprep.subr.mxu0 0.0
          %1268 = vmatpush1.msra.mxu0 0.0
          %1269 = vmatprep.subr.mxu0 0.0
          %1270 = vmatpush1.msra.mxu0 0.0
          %1271 = vmatprep.subr.mxu0 0.0
          %1272 = vmatpush1.msra.mxu0 0.0
          %1273 = vmatprep.subr.mxu0 0.0
          %1274 = vmatpush1.msra.mxu0 0.0
          %1275 = vmatprep.subr.mxu0 0.0
          %1276 = vmatpush1.msra.mxu0 0.0
          %1277 = vmatprep.subr.mxu0 0.0
          %1278 = vmatpush1.msra.mxu0 0.0
          %1279 = vmatprep.subr.mxu0 0.0
          %1280 = vmatpush1.msra.mxu0 0.0
          %1281 = vmatprep.subr.mxu0 0.0
          %1282 = vmatpush1.msra.mxu0 0.0
          %1283 = vmatprep.subr.mxu0 0.0
          %1284 = vmatpush1.msra.mxu0 0.0
          %1285 = vmatprep.subr.mxu0 0.0
          %1286 = vmatpush1.msra.mxu0 0.0
          %1287 = vmatprep.subr.mxu0 0.0
          %1288 = vmatpush1.msra.mxu0 0.0
          %1289 = vmatprep.subr.mxu0 0.0
          %1290 = vmatpush1.msra.mxu0 0.0
          %1291 = vmatprep.subr.mxu0 0.0
          %1292 = vmatpush1.msra.mxu0 0.0
          %1293 = vmatprep.subr.mxu0 0.0
          %1294 = vmatpush1.msra.mxu0 %v1257
          %1295 = vmatprep.subr.mxu0 0.0
          %1296 = vmatpush1.msra.mxu0 %v1252
          %1297 = vmatprep.subr.mxu0 0.0
          %1298 = vmatpush2.msra.mxu0 0.0
          %1299 = vmatprep.subr.mxu0 0.0
          %1300 = vmatpush2.msra.mxu0 0.0
          %1301 = vmatprep.subr.mxu0 0.0
          %1302 = vmatpush2.msra.mxu0 0.0
          %1303 = vmatprep.subr.mxu0 0.0
          %1304 = vmatpush2.msra.mxu0 0.0
          %1305 = vmatprep.subr.mxu0 0.0
          %1306 = vmatpush2.msra.mxu0 0.0
          %1307 = vmatprep.subr.mxu0 0.0
          %1308 = vmatpush2.msra.mxu0 0.0
          %1309 = vmatprep.subr.mxu0 0.0
          %1310 = vmatpush2.msra.mxu0 0.0
          %1311 = vmatprep.subr.mxu0 0.0
          %1312 = vmatpush2.msra.mxu0 0.0
          %1313 = vmatprep.subr.mxu0 0.0
          %1314 = vmatpush2.msra.mxu0 0.0
          %1315 = vmatprep.subr.mxu0 0.0
          %1316 = vmatpush2.msra.mxu0 0.0
          %1317 = vmatprep.subr.mxu0 0.0
          %1318 = vmatpush2.msra.mxu0 0.0
          %1319 = vmatprep.subr.mxu0 0.0
          %1320 = vmatpush2.msra.mxu0 0.0
          %1321 = vmatprep.subr.mxu0 0.0
          %1322 = vmatpush2.msra.mxu0 0.0
          %1323 = vmatprep.subr.mxu0 0.0
          %1324 = vmatpush2.msra.mxu0 0.0
          %1325 = vmatprep.subr.mxu0 0.0
          %1326 = vmatpush2.msra.mxu0 0.0
          %1327 = vmatprep.subr.mxu0 0.0
          %1328 = vmatpush2.msra.mxu0 0.0
          %1329 = vmatprep.mubr.f32.mxu0 0.0
          %1330 = vmatmul.mubr.f32.gmra.mxu0 %v1263
          %v1331 = vpop.f32.mrf.mxu0
          %v1332 = vadd.f32 0.0, %v1331
          %v1333 = vpop.f32.mrf.mxu0
          %1334 = vdwg.mxu0
          %v1335 = vadd.f32 %v1260, %v1332
          %vm1336 = vcmask 254976
          %1337 = vst.msk [vmem:[#allocation2] sm:$0x3] %vm1336, %v1335
        $region188: #{tpu_custom_call.1} parent=119 // pred_fallthru
          _
        %p1338 = pnand %p1065, %p1049
        %p1339 = pneg %p1338
        // Predicated region
        $region189: #{tpu_custom_call.1} parent=119 // pred_check
          _
        $region190: #{tpu_custom_call.1} parent=119 // pred_check_branch
          %1341 = sbr.rel (%p1338) target = $region192
        $region191: #{tpu_custom_call.1} parent=119 // pred_region
          %v1342 = vld [vmem:[#allocation2] sm:$0x3]
          %v1343 = vld [vmem:[#allocation12] sm:$0xff]
          %v1344 = vld [vmem:[#allocation12 + $0x8] sm:$0xff]
          %v1345 = vld [vmem:[#allocation12 + $0x10] sm:$0xff]
          %v1346 = vld [vmem:[#allocation12 + $0x18] sm:$0xff]
          %v1347 = vld [vmem:[#allocation13] sm:$0x1]
          %v1349 = vlaneseq
          %v1350 = vshrl.u32 %v1349, 7
          %v1351 = vsub.s32 0, %v1350
          %v1352 = vrot.slane %v1347, %v1351
          %vm1354 = vcmask 261120
          %v1356 = vsel %vm1354, %v1342, 0
          %1358 = vmatprep.subr.mxu0 0.0
          %1359 = vmatpush1.msra.mxu0 0.0
          %1360 = vmatprep.subr.mxu0 0.0
          %1361 = vmatpush1.msra.mxu0 0.0
          %1362 = vmatprep.subr.mxu0 0.0
          %1363 = vmatpush1.msra.mxu0 0.0
          %1364 = vmatprep.subr.mxu0 0.0
          %1365 = vmatpush1.msra.mxu0 0.0
          %1366 = vmatprep.subr.mxu0 0.0
          %1367 = vmatpush1.msra.mxu0 0.0
          %1368 = vmatprep.subr.mxu0 0.0
          %1369 = vmatpush1.msra.mxu0 0.0
          %1370 = vmatprep.subr.mxu0 0.0
          %1371 = vmatpush1.msra.mxu0 0.0
          %1372 = vmatprep.subr.mxu0 0.0
          %1373 = vmatpush1.msra.mxu0 0.0
          %1374 = vmatprep.subr.mxu0 0.0
          %1375 = vmatpush1.msra.mxu0 0.0
          %1376 = vmatprep.subr.mxu0 0.0
          %1377 = vmatpush1.msra.mxu0 0.0
          %1378 = vmatprep.subr.mxu0 0.0
          %1379 = vmatpush1.msra.mxu0 0.0
          %1380 = vmatprep.subr.mxu0 0.0
          %1381 = vmatpush1.msra.mxu0 0.0
          %1382 = vmatprep.subr.mxu0 0.0
          %1383 = vmatpush1.msra.mxu0 %v1346
          %1384 = vmatprep.subr.mxu0 0.0
          %1385 = vmatpush1.msra.mxu0 %v1345
          %1386 = vmatprep.subr.mxu0 0.0
          %1387 = vmatpush1.msra.mxu0 %v1344
          %1388 = vmatprep.subr.mxu0 0.0
          %1389 = vmatpush1.msra.mxu0 %v1343
          %1390 = vmatprep.subr.mxu0 0.0
          %1391 = vmatpush2.msra.mxu0 0.0
          %1392 = vmatprep.subr.mxu0 0.0
          %1393 = vmatpush2.msra.mxu0 0.0
          %1394 = vmatprep.subr.mxu0 0.0
          %1395 = vmatpush2.msra.mxu0 0.0
          %1396 = vmatprep.subr.mxu0 0.0
          %1397 = vmatpush2.msra.mxu0 0.0
          %1398 = vmatprep.subr.mxu0 0.0
          %1399 = vmatpush2.msra.mxu0 0.0
          %1400 = vmatprep.subr.mxu0 0.0
          %1401 = vmatpush2.msra.mxu0 0.0
          %1402 = vmatprep.subr.mxu0 0.0
          %1403 = vmatpush2.msra.mxu0 0.0
          %1404 = vmatprep.subr.mxu0 0.0
          %1405 = vmatpush2.msra.mxu0 0.0
          %1406 = vmatprep.subr.mxu0 0.0
          %1407 = vmatpush2.msra.mxu0 0.0
          %1408 = vmatprep.subr.mxu0 0.0
          %1409 = vmatpush2.msra.mxu0 0.0
          %1410 = vmatprep.subr.mxu0 0.0
          %1411 = vmatpush2.msra.mxu0 0.0
          %1412 = vmatprep.subr.mxu0 0.0
          %1413 = vmatpush2.msra.mxu0 0.0
          %1414 = vmatprep.subr.mxu0 0.0
          %1415 = vmatpush2.msra.mxu0 0.0
          %1416 = vmatprep.subr.mxu0 0.0
          %1417 = vmatpush2.msra.mxu0 0.0
          %1418 = vmatprep.subr.mxu0 0.0
          %1419 = vmatpush2.msra.mxu0 0.0
          %1420 = vmatprep.subr.mxu0 0.0
          %1421 = vmatpush2.msra.mxu0 0.0
          %1422 = vmatprep.mubr.f32.mxu0 0.0
          %1423 = vmatmul.mubr.f32.gmra.mxu0 %v1356
          %v1424 = vpop.f32.mrf.mxu0
          %v1425 = vadd.f32 %v1352, %v1424
          %v1426 = vpop.f32.mrf.mxu0
          %1427 = vdwg.mxu0
          %v1428 = vmax.f32 %v1425, 0.0
          %v1429 = vld [vmem:[#allocation15] sm:$0xff]
          %v1430 = vld [vmem:[#allocation15 + $0x8] sm:$0xff]
          %v1431 = vld [vmem:[#allocation15 + $0x10] sm:$0xff]
          %v1432 = vld [vmem:[#allocation15 + $0x18] sm:$0xff]
          %v1433 = vld [vmem:[#allocation16] sm:$0x1]
          %v1435 = vlaneseq
          %v1436 = vshrl.u32 %v1435, 7
          %v1437 = vsub.s32 0, %v1436
          %v1438 = vrot.slane %v1433, %v1437
          %v1441 = vsel %vm1354, %v1428, 0
          %1443 = vmatprep.subr.mxu0 0.0
          %1444 = vmatpush1.msra.mxu0 0.0
          %1445 = vmatprep.subr.mxu0 0.0
          %1446 = vmatpush1.msra.mxu0 0.0
          %1447 = vmatprep.subr.mxu0 0.0
          %1448 = vmatpush1.msra.mxu0 0.0
          %1449 = vmatprep.subr.mxu0 0.0
          %1450 = vmatpush1.msra.mxu0 0.0
          %1451 = vmatprep.subr.mxu0 0.0
          %1452 = vmatpush1.msra.mxu0 0.0
          %1453 = vmatprep.subr.mxu0 0.0
          %1454 = vmatpush1.msra.mxu0 0.0
          %1455 = vmatprep.subr.mxu0 0.0
          %1456 = vmatpush1.msra.mxu0 0.0
          %1457 = vmatprep.subr.mxu0 0.0
          %1458 = vmatpush1.msra.mxu0 0.0
          %1459 = vmatprep.subr.mxu0 0.0
          %1460 = vmatpush1.msra.mxu0 0.0
          %1461 = vmatprep.subr.mxu0 0.0
          %1462 = vmatpush1.msra.mxu0 0.0
          %1463 = vmatprep.subr.mxu0 0.0
          %1464 = vmatpush1.msra.mxu0 0.0
          %1465 = vmatprep.subr.mxu0 0.0
          %1466 = vmatpush1.msra.mxu0 0.0
          %1467 = vmatprep.subr.mxu0 0.0
          %1468 = vmatpush1.msra.mxu0 %v1432
          %1469 = vmatprep.subr.mxu0 0.0
          %1470 = vmatpush1.msra.mxu0 %v1431
          %1471 = vmatprep.subr.mxu0 0.0
          %1472 = vmatpush1.msra.mxu0 %v1430
          %1473 = vmatprep.subr.mxu0 0.0
          %1474 = vmatpush1.msra.mxu0 %v1429
          %1475 = vmatprep.subr.mxu0 0.0
          %1476 = vmatpush2.msra.mxu0 0.0
          %1477 = vmatprep.subr.mxu0 0.0
          %1478 = vmatpush2.msra.mxu0 0.0
          %1479 = vmatprep.subr.mxu0 0.0
          %1480 = vmatpush2.msra.mxu0 0.0
          %1481 = vmatprep.subr.mxu0 0.0
          %1482 = vmatpush2.msra.mxu0 0.0
          %1483 = vmatprep.subr.mxu0 0.0
          %1484 = vmatpush2.msra.mxu0 0.0
          %1485 = vmatprep.subr.mxu0 0.0
          %1486 = vmatpush2.msra.mxu0 0.0
          %1487 = vmatprep.subr.mxu0 0.0
          %1488 = vmatpush2.msra.mxu0 0.0
          %1489 = vmatprep.subr.mxu0 0.0
          %1490 = vmatpush2.msra.mxu0 0.0
          %1491 = vmatprep.subr.mxu0 0.0
          %1492 = vmatpush2.msra.mxu0 0.0
          %1493 = vmatprep.subr.mxu0 0.0
          %1494 = vmatpush2.msra.mxu0 0.0
          %1495 = vmatprep.subr.mxu0 0.0
          %1496 = vmatpush2.msra.mxu0 0.0
          %1497 = vmatprep.subr.mxu0 0.0
          %1498 = vmatpush2.msra.mxu0 0.0
          %1499 = vmatprep.subr.mxu0 0.0
          %1500 = vmatpush2.msra.mxu0 0.0
          %1501 = vmatprep.subr.mxu0 0.0
          %1502 = vmatpush2.msra.mxu0 0.0
          %1503 = vmatprep.subr.mxu0 0.0
          %1504 = vmatpush2.msra.mxu0 0.0
          %1505 = vmatprep.subr.mxu0 0.0
          %1506 = vmatpush2.msra.mxu0 0.0
          %1507 = vmatprep.mubr.f32.mxu0 0.0
          %1508 = vmatmul.mubr.f32.gmra.mxu0 %v1441
          %v1509 = vpop.f32.mrf.mxu0
          %v1510 = vadd.f32 %v1438, %v1509
          %v1511 = vpop.f32.mrf.mxu0
          %1512 = vdwg.mxu0
          %v1513 = vld [vmem:[#allocation19] sm:$0xff]
          %v1514 = vld [vmem:[#allocation19 + $0x8] sm:$0xff]
          %v1515 = vld [vmem:[#allocation19 + $0x10] sm:$0xff]
          %v1516 = vld [vmem:[#allocation19 + $0x18] sm:$0xff]
          %v1518 = vsel %vm1354, %v1510, 0
          %1520 = vmatprep.subr.mxu0 0.0
          %1521 = vmatpush1.msra.mxu0 0.0
          %1522 = vmatprep.subr.mxu0 0.0
          %1523 = vmatpush1.msra.mxu0 0.0
          %1524 = vmatprep.subr.mxu0 0.0
          %1525 = vmatpush1.msra.mxu0 0.0
          %1526 = vmatprep.subr.mxu0 0.0
          %1527 = vmatpush1.msra.mxu0 0.0
          %1528 = vmatprep.subr.mxu0 0.0
          %1529 = vmatpush1.msra.mxu0 0.0
          %1530 = vmatprep.subr.mxu0 0.0
          %1531 = vmatpush1.msra.mxu0 0.0
          %1532 = vmatprep.subr.mxu0 0.0
          %1533 = vmatpush1.msra.mxu0 0.0
          %1534 = vmatprep.subr.mxu0 0.0
          %1535 = vmatpush1.msra.mxu0 0.0
          %1536 = vmatprep.subr.mxu0 0.0
          %1537 = vmatpush1.msra.mxu0 0.0
          %1538 = vmatprep.subr.mxu0 0.0
          %1539 = vmatpush1.msra.mxu0 0.0
          %1540 = vmatprep.subr.mxu0 0.0
          %1541 = vmatpush1.msra.mxu0 0.0
          %1542 = vmatprep.subr.mxu0 0.0
          %1543 = vmatpush1.msra.mxu0 0.0
          %1544 = vmatprep.subr.mxu0 0.0
          %1545 = vmatpush1.msra.mxu0 %v1516
          %1546 = vmatprep.subr.mxu0 0.0
          %1547 = vmatpush1.msra.mxu0 %v1515
          %1548 = vmatprep.subr.mxu0 0.0
          %1549 = vmatpush1.msra.mxu0 %v1514
          %1550 = vmatprep.subr.mxu0 0.0
          %1551 = vmatpush1.msra.mxu0 %v1513
          %1552 = vmatprep.subr.mxu0 0.0
          %1553 = vmatpush2.msra.mxu0 0.0
          %1554 = vmatprep.subr.mxu0 0.0
          %1555 = vmatpush2.msra.mxu0 0.0
          %1556 = vmatprep.subr.mxu0 0.0
          %1557 = vmatpush2.msra.mxu0 0.0
          %1558 = vmatprep.subr.mxu0 0.0
          %1559 = vmatpush2.msra.mxu0 0.0
          %1560 = vmatprep.subr.mxu0 0.0
          %1561 = vmatpush2.msra.mxu0 0.0
          %1562 = vmatprep.subr.mxu0 0.0
          %1563 = vmatpush2.msra.mxu0 0.0
          %1564 = vmatprep.subr.mxu0 0.0
          %1565 = vmatpush2.msra.mxu0 0.0
          %1566 = vmatprep.subr.mxu0 0.0
          %1567 = vmatpush2.msra.mxu0 0.0
          %1568 = vmatprep.subr.mxu0 0.0
          %1569 = vmatpush2.msra.mxu0 0.0
          %1570 = vmatprep.subr.mxu0 0.0
          %1571 = vmatpush2.msra.mxu0 0.0
          %1572 = vmatprep.subr.mxu0 0.0
          %1573 = vmatpush2.msra.mxu0 0.0
          %1574 = vmatprep.subr.mxu0 0.0
          %1575 = vmatpush2.msra.mxu0 0.0
          %1576 = vmatprep.subr.mxu0 0.0
          %1577 = vmatpush2.msra.mxu0 0.0
          %1578 = vmatprep.subr.mxu0 0.0
          %1579 = vmatpush2.msra.mxu0 0.0
          %1580 = vmatprep.subr.mxu0 0.0
          %1581 = vmatpush2.msra.mxu0 0.0
          %1582 = vmatprep.subr.mxu0 0.0
          %1583 = vmatpush2.msra.mxu0 0.0
          %1584 = vmatprep.mubr.f32.mxu0 0.0
          %1585 = vmatmul.mubr.f32.gmra.mxu0 %v1518
          %v1586 = vpop.f32.mrf.mxu0
          %v1587 = vadd.f32 0.0, %v1586
          %v1588 = vpop.f32.mrf.mxu0
          %1589 = vdwg.mxu0
          %vm1590 = vcmask 254976
          %1591 = vst.msk [vmem:[#allocation3] sm:$0x3] %vm1590, %v1587
        $region192: #{tpu_custom_call.1} parent=119 // pred_fallthru
          _
        %p1592 = scmp.eq.s32.totalorder %s51, 1
        // Predicated region
        $region193: #{tpu_custom_call.1} parent=119 // pred_check
          %p1593 = pneg %p1592
        $region194: #{tpu_custom_call.1} parent=119 // pred_check_branch
          %1595 = sbr.rel (%p1593) target = $region196
        $region195: #{tpu_custom_call.1} parent=119 // pred_region
          %v1596 = vld [vmem:[%s894] sm:$0x1]
          %v1597 = vlaneseq
          %v1598 = vshrl.u32 %v1597, 7
          %v1599 = vsub.s32 0, %v1598
          %v1600 = vrot.slane %v1596, %v1599
          %vm1601 = vcmp.eq.s32.totalorder %v1057, %v1600
          %v1602 = vsel %vm1601, 1, 0
          %v1603 = vcvt.s32.f32 %v1602
          %v1604 = vld [vmem:[%s1042] sm:$0xff]
          %v1605 = vld [vmem:[%s1042 + $0x8] sm:$0xff]
          %v1606 = vld [vmem:[#allocation3] sm:$0x3]
          %1607 = vxpose.xlu0.b32.start [1/16] %v1064, 128
          %1608 = vxpose.xlu0.b32.cont [2/16] 0.0, 128
          %1609 = vxpose.xlu0.b32.cont [3/16] 0.0, 128
          %1610 = vxpose.xlu0.b32.cont [4/16] 0.0, 128
          %1611 = vxpose.xlu0.b32.cont [5/16] 0.0, 128
          %1612 = vxpose.xlu0.b32.cont [6/16] 0.0, 128
          %1613 = vxpose.xlu0.b32.cont [7/16] 0.0, 128
          %1614 = vxpose.xlu0.b32.cont [8/16] 0.0, 128
          %1615 = vxpose.xlu0.b32.cont [9/16] 0.0, 128
          %1616 = vxpose.xlu0.b32.cont [10/16] 0.0, 128
          %1617 = vxpose.xlu0.b32.cont [11/16] 0.0, 128
          %1618 = vxpose.xlu0.b32.cont [12/16] 0.0, 128
          %1619 = vxpose.xlu0.b32.cont [13/16] 0.0, 128
          %1620 = vxpose.xlu0.b32.cont [14/16] 0.0, 128
          %1621 = vxpose.xlu0.b32.cont [15/16] 0.0, 128
          %1622 = vxpose.xlu0.b32.end [16/16] 0.0, 128
          %v1623 = vpop.trf.xlu0
          %v1624 = vpop.trf.xlu0
          %v1625 = vpop.trf.xlu0
          %v1626 = vpop.trf.xlu0
          %v1627 = vpop.trf.xlu0
          %v1628 = vpop.trf.xlu0
          %v1629 = vpop.trf.xlu0
          %v1630 = vpop.trf.xlu0
          %v1631 = vpop.trf.xlu0
          %v1632 = vpop.trf.xlu0
          %v1633 = vpop.trf.xlu0
          %v1634 = vpop.trf.xlu0
          %v1635 = vpop.trf.xlu0
          %v1636 = vpop.trf.xlu0
          %v1637 = vpop.trf.xlu0
          %v1638 = vpop.trf.xlu0
          %vm1639 = vcmask 15360
          %v1641 = vsel %vm1639, %v1623, 0
          %v1644 = vsel %vm1639, %v1624, 0
          %vm1646 = vcmask 1041408
          %v1648 = vsel %vm1646, %v1606, 0
          %1650 = vmatprep.subr.mxu0 0.0
          %1651 = vmatpush1.msra.mxu0 0.0
          %1652 = vmatprep.subr.mxu0 0.0
          %1653 = vmatpush1.msra.mxu0 0.0
          %1654 = vmatprep.subr.mxu0 0.0
          %1655 = vmatpush1.msra.mxu0 0.0
          %1656 = vmatprep.subr.mxu0 0.0
          %1657 = vmatpush1.msra.mxu0 0.0
          %1658 = vmatprep.subr.mxu0 0.0
          %1659 = vmatpush1.msra.mxu0 0.0
          %1660 = vmatprep.subr.mxu0 0.0
          %1661 = vmatpush1.msra.mxu0 0.0
          %1662 = vmatprep.subr.mxu0 0.0
          %1663 = vmatpush1.msra.mxu0 0.0
          %1664 = vmatprep.subr.mxu0 0.0
          %1665 = vmatpush1.msra.mxu0 0.0
          %1666 = vmatprep.subr.mxu0 0.0
          %1667 = vmatpush1.msra.mxu0 0.0
          %1668 = vmatprep.subr.mxu0 0.0
          %1669 = vmatpush1.msra.mxu0 0.0
          %1670 = vmatprep.subr.mxu0 0.0
          %1671 = vmatpush1.msra.mxu0 0.0
          %1672 = vmatprep.subr.mxu0 0.0
          %1673 = vmatpush1.msra.mxu0 0.0
          %1674 = vmatprep.subr.mxu0 0.0
          %1675 = vmatpush1.msra.mxu0 0.0
          %1676 = vmatprep.subr.mxu0 0.0
          %1677 = vmatpush1.msra.mxu0 0.0
          %1678 = vmatprep.subr.mxu0 0.0
          %1679 = vmatpush1.msra.mxu0 0.0
          %1680 = vmatprep.subr.mxu0 0.0
          %1681 = vmatpush1.msra.mxu0 %v1648
          %1682 = vmatprep.subr.mxu0 0.0
          %1683 = vmatpush2.msra.mxu0 0.0
          %1684 = vmatprep.subr.mxu0 0.0
          %1685 = vmatpush2.msra.mxu0 0.0
          %1686 = vmatprep.subr.mxu0 0.0
          %1687 = vmatpush2.msra.mxu0 0.0
          %1688 = vmatprep.subr.mxu0 0.0
          %1689 = vmatpush2.msra.mxu0 0.0
          %1690 = vmatprep.subr.mxu0 0.0
          %1691 = vmatpush2.msra.mxu0 0.0
          %1692 = vmatprep.subr.mxu0 0.0
          %1693 = vmatpush2.msra.mxu0 0.0
          %1694 = vmatprep.subr.mxu0 0.0
          %1695 = vmatpush2.msra.mxu0 0.0
          %1696 = vmatprep.subr.mxu0 0.0
          %1697 = vmatpush2.msra.mxu0 0.0
          %1698 = vmatprep.subr.mxu0 0.0
          %1699 = vmatpush2.msra.mxu0 0.0
          %1700 = vmatprep.subr.mxu0 0.0
          %1701 = vmatpush2.msra.mxu0 0.0
          %1702 = vmatprep.subr.mxu0 0.0
          %1703 = vmatpush2.msra.mxu0 0.0
          %1704 = vmatprep.subr.mxu0 0.0
          %1705 = vmatpush2.msra.mxu0 0.0
          %1706 = vmatprep.subr.mxu0 0.0
          %1707 = vmatpush2.msra.mxu0 0.0
          %1708 = vmatprep.subr.mxu0 0.0
          %1709 = vmatpush2.msra.mxu0 0.0
          %1710 = vmatprep.subr.mxu0 0.0
          %1711 = vmatpush2.msra.mxu0 0.0
          %1712 = vmatprep.subr.mxu0 0.0
          %1713 = vmatpush2.msra.mxu0 0.0
          %1714 = vmatprep.mubr.f32.mxu0 0.0
          %1715 = vmatmul.mubr.f32.gmra.mxu0 %v1641
          %v1716 = vpop.f32.mrf.mxu0
          %v1717 = vadd.f32 0.0, %v1716
          %v1718 = vpop.f32.mrf.mxu0
          %1719 = vmatprep.mubr.f32.mxu0 0.0
          %1720 = vmatmul.mubr.f32.gmra.mxu0 %v1644
          %v1721 = vpop.f32.mrf.mxu0
          %v1722 = vadd.f32 0.0, %v1721
          %v1723 = vpop.f32.mrf.mxu0
          %1724 = vdwg.mxu0
          %v1725 = vld [vmem:[#allocation18] sm:$0xf]
          %vm1726 = vcmask 31744
          %v1728 = vsel %vm1726, %v1604, 0
          %v1731 = vsel %vm1726, %v1605, 0
          %vm1733 = vcmask 1043456
          %v1735 = vsel %vm1733, %v1725, 0
          %1737 = vmatprep.subr.mxu0 0.0
          %1738 = vmatpush1.msra.mxu0 0.0
          %1739 = vmatprep.subr.mxu0 0.0
          %1740 = vmatpush1.msra.mxu0 0.0
          %1741 = vmatprep.subr.mxu0 0.0
          %1742 = vmatpush1.msra.mxu0 0.0
          %1743 = vmatprep.subr.mxu0 0.0
          %1744 = vmatpush1.msra.mxu0 0.0
          %1745 = vmatprep.subr.mxu0 0.0
          %1746 = vmatpush1.msra.mxu0 0.0
          %1747 = vmatprep.subr.mxu0 0.0
          %1748 = vmatpush1.msra.mxu0 0.0
          %1749 = vmatprep.subr.mxu0 0.0
          %1750 = vmatpush1.msra.mxu0 0.0
          %1751 = vmatprep.subr.mxu0 0.0
          %1752 = vmatpush1.msra.mxu0 0.0
          %1753 = vmatprep.subr.mxu0 0.0
          %1754 = vmatpush1.msra.mxu0 0.0
          %1755 = vmatprep.subr.mxu0 0.0
          %1756 = vmatpush1.msra.mxu0 0.0
          %1757 = vmatprep.subr.mxu0 0.0
          %1758 = vmatpush1.msra.mxu0 0.0
          %1759 = vmatprep.subr.mxu0 0.0
          %1760 = vmatpush1.msra.mxu0 0.0
          %1761 = vmatprep.subr.mxu0 0.0
          %1762 = vmatpush1.msra.mxu0 0.0
          %1763 = vmatprep.subr.mxu0 0.0
          %1764 = vmatpush1.msra.mxu0 0.0
          %1765 = vmatprep.subr.mxu0 0.0
          %1766 = vmatpush1.msra.mxu0 0.0
          %1767 = vmatprep.subr.mxu0 0.0
          %1768 = vmatpush1.msra.mxu0 %v1735
          %1769 = vmatprep.subr.mxu0 0.0
          %1770 = vmatpush2.msra.mxu0 0.0
          %1771 = vmatprep.subr.mxu0 0.0
          %1772 = vmatpush2.msra.mxu0 0.0
          %1773 = vmatprep.subr.mxu0 0.0
          %1774 = vmatpush2.msra.mxu0 0.0
          %1775 = vmatprep.subr.mxu0 0.0
          %1776 = vmatpush2.msra.mxu0 0.0
          %1777 = vmatprep.subr.mxu0 0.0
          %1778 = vmatpush2.msra.mxu0 0.0
          %1779 = vmatprep.subr.mxu0 0.0
          %1780 = vmatpush2.msra.mxu0 0.0
          %1781 = vmatprep.subr.mxu0 0.0
          %1782 = vmatpush2.msra.mxu0 0.0
          %1783 = vmatprep.subr.mxu0 0.0
          %1784 = vmatpush2.msra.mxu0 0.0
          %1785 = vmatprep.subr.mxu0 0.0
          %1786 = vmatpush2.msra.mxu0 0.0
          %1787 = vmatprep.subr.mxu0 0.0
          %1788 = vmatpush2.msra.mxu0 0.0
          %1789 = vmatprep.subr.mxu0 0.0
          %1790 = vmatpush2.msra.mxu0 0.0
          %1791 = vmatprep.subr.mxu0 0.0
          %1792 = vmatpush2.msra.mxu0 0.0
          %1793 = vmatprep.subr.mxu0 0.0
          %1794 = vmatpush2.msra.mxu0 0.0
          %1795 = vmatprep.subr.mxu0 0.0
          %1796 = vmatpush2.msra.mxu0 0.0
          %1797 = vmatprep.subr.mxu0 0.0
          %1798 = vmatpush2.msra.mxu0 0.0
          %1799 = vmatprep.subr.mxu0 0.0
          %1800 = vmatpush2.msra.mxu0 0.0
          %1801 = vmatprep.mubr.f32.mxu0 0.0
          %1802 = vmatmul.mubr.f32.gmra.mxu0 %v1728
          %v1803 = vpop.f32.mrf.mxu0
          %v1804 = vadd.f32 %v1717, %v1803
          %v1805 = vpop.f32.mrf.mxu0
          %1806 = vmatprep.mubr.f32.mxu0 0.0
          %1807 = vmatmul.mubr.f32.gmra.mxu0 %v1731
          %v1808 = vpop.f32.mrf.mxu0
          %v1809 = vadd.f32 %v1722, %v1808
          %v1810 = vpop.f32.mrf.mxu0
          %1811 = vdwg.mxu0
          %v1812 = vld [vmem:[#allocation21] sm:$0x1]
          %v1814 = vlaneseq
          %v1815 = vshrl.u32 %v1814, 7
          %v1816 = vsub.s32 0, %v1815
          %v1817 = vrot.slane %v1812, %v1816
          %v1819 = vadd.f32 %v1804, %v1817
          %v1820 = vadd.f32 %v1809, %v1817
          %v1821 = vmax.f32 %v1819, 0.0
          %v1822 = vmax.f32 %v1820, 0.0
          %v1823 = vld [vmem:[%s15] sm:$0xff]
          %v1824 = vld [vmem:[%s15 + $0x8] sm:$0xff]
          %v1825 = vld [vmem:[%s15 + $0x10] sm:$0xff]
          %v1826 = vld [vmem:[%s15 + $0x18] sm:$0xff]
          %v1827 = vld [vmem:[%s16] sm:$0x1]
          %v1829 = vlaneseq
          %v1830 = vshrl.u32 %v1829, 7
          %v1831 = vsub.s32 0, %v1830
          %v1832 = vrot.slane %v1827, %v1831
          %vm1834 = vcmask 261120
          %v1836 = vsel %vm1834, %v1821, 0
          %v1839 = vsel %vm1834, %v1822, 0
          %1841 = vmatprep.subr.mxu0 0.0
          %1842 = vmatpush1.msra.mxu0 0.0
          %1843 = vmatprep.subr.mxu0 0.0
          %1844 = vmatpush1.msra.mxu0 0.0
          %1845 = vmatprep.subr.mxu0 0.0
          %1846 = vmatpush1.msra.mxu0 0.0
          %1847 = vmatprep.subr.mxu0 0.0
          %1848 = vmatpush1.msra.mxu0 0.0
          %1849 = vmatprep.subr.mxu0 0.0
          %1850 = vmatpush1.msra.mxu0 0.0
          %1851 = vmatprep.subr.mxu0 0.0
          %1852 = vmatpush1.msra.mxu0 0.0
          %1853 = vmatprep.subr.mxu0 0.0
          %1854 = vmatpush1.msra.mxu0 0.0
          %1855 = vmatprep.subr.mxu0 0.0
          %1856 = vmatpush1.msra.mxu0 0.0
          %1857 = vmatprep.subr.mxu0 0.0
          %1858 = vmatpush1.msra.mxu0 0.0
          %1859 = vmatprep.subr.mxu0 0.0
          %1860 = vmatpush1.msra.mxu0 0.0
          %1861 = vmatprep.subr.mxu0 0.0
          %1862 = vmatpush1.msra.mxu0 0.0
          %1863 = vmatprep.subr.mxu0 0.0
          %1864 = vmatpush1.msra.mxu0 0.0
          %1865 = vmatprep.subr.mxu0 0.0
          %1866 = vmatpush1.msra.mxu0 %v1826
          %1867 = vmatprep.subr.mxu0 0.0
          %1868 = vmatpush1.msra.mxu0 %v1825
          %1869 = vmatprep.subr.mxu0 0.0
          %1870 = vmatpush1.msra.mxu0 %v1824
          %1871 = vmatprep.subr.mxu0 0.0
          %1872 = vmatpush1.msra.mxu0 %v1823
          %1873 = vmatprep.subr.mxu0 0.0
          %1874 = vmatpush2.msra.mxu0 0.0
          %1875 = vmatprep.subr.mxu0 0.0
          %1876 = vmatpush2.msra.mxu0 0.0
          %1877 = vmatprep.subr.mxu0 0.0
          %1878 = vmatpush2.msra.mxu0 0.0
          %1879 = vmatprep.subr.mxu0 0.0
          %1880 = vmatpush2.msra.mxu0 0.0
          %1881 = vmatprep.subr.mxu0 0.0
          %1882 = vmatpush2.msra.mxu0 0.0
          %1883 = vmatprep.subr.mxu0 0.0
          %1884 = vmatpush2.msra.mxu0 0.0
          %1885 = vmatprep.subr.mxu0 0.0
          %1886 = vmatpush2.msra.mxu0 0.0
          %1887 = vmatprep.subr.mxu0 0.0
          %1888 = vmatpush2.msra.mxu0 0.0
          %1889 = vmatprep.subr.mxu0 0.0
          %1890 = vmatpush2.msra.mxu0 0.0
          %1891 = vmatprep.subr.mxu0 0.0
          %1892 = vmatpush2.msra.mxu0 0.0
          %1893 = vmatprep.subr.mxu0 0.0
          %1894 = vmatpush2.msra.mxu0 0.0
          %1895 = vmatprep.subr.mxu0 0.0
          %1896 = vmatpush2.msra.mxu0 0.0
          %1897 = vmatprep.subr.mxu0 0.0
          %1898 = vmatpush2.msra.mxu0 0.0
          %1899 = vmatprep.subr.mxu0 0.0
          %1900 = vmatpush2.msra.mxu0 0.0
          %1901 = vmatprep.subr.mxu0 0.0
          %1902 = vmatpush2.msra.mxu0 0.0
          %1903 = vmatprep.subr.mxu0 0.0
          %1904 = vmatpush2.msra.mxu0 0.0
          %1905 = vmatprep.mubr.f32.mxu0 0.0
          %1906 = vmatmul.mubr.f32.gmra.mxu0 %v1836
          %v1907 = vpop.f32.mrf.mxu0
          %v1908 = vadd.f32 %v1832, %v1907
          %v1909 = vpop.f32.mrf.mxu0
          %1910 = vmatprep.mubr.f32.mxu0 0.0
          %1911 = vmatmul.mubr.f32.gmra.mxu0 %v1839
          %v1912 = vpop.f32.mrf.mxu0
          %v1913 = vadd.f32 %v1832, %v1912
          %v1914 = vpop.f32.mrf.mxu0
          %1915 = vdwg.mxu0
          %v1916 = vld [vmem:[#allocation2] sm:$0x3]
          %vm1917 = vcmask 130048
          %v1919 = vsel %vm1917, %v1603, 0
          %1921 = vmatprep.subr.mxu0 0.0
          %1922 = vmatpush1.msra.mxu0 0.0
          %1923 = vmatprep.subr.mxu0 0.0
          %1924 = vmatpush1.msra.mxu0 0.0
          %1925 = vmatprep.subr.mxu0 0.0
          %1926 = vmatpush1.msra.mxu0 0.0
          %1927 = vmatprep.subr.mxu0 0.0
          %1928 = vmatpush1.msra.mxu0 0.0
          %1929 = vmatprep.subr.mxu0 0.0
          %1930 = vmatpush1.msra.mxu0 0.0
          %1931 = vmatprep.subr.mxu0 0.0
          %1932 = vmatpush1.msra.mxu0 0.0
          %1933 = vmatprep.subr.mxu0 0.0
          %1934 = vmatpush1.msra.mxu0 0.0
          %1935 = vmatprep.subr.mxu0 0.0
          %1936 = vmatpush1.msra.mxu0 0.0
          %1937 = vmatprep.subr.mxu0 0.0
          %1938 = vmatpush1.msra.mxu0 0.0
          %1939 = vmatprep.subr.mxu0 0.0
          %1940 = vmatpush1.msra.mxu0 0.0
          %1941 = vmatprep.subr.mxu0 0.0
          %1942 = vmatpush1.msra.mxu0 0.0
          %1943 = vmatprep.subr.mxu0 0.0
          %1944 = vmatpush1.msra.mxu0 0.0
          %1945 = vmatprep.subr.mxu0 0.0
          %1946 = vmatpush1.msra.mxu0 0.0
          %1947 = vmatprep.subr.mxu0 0.0
          %1948 = vmatpush1.msra.mxu0 0.0
          %1949 = vmatprep.subr.mxu0 0.0
          %1950 = vmatpush1.msra.mxu0 %v1913
          %1951 = vmatprep.subr.mxu0 0.0
          %1952 = vmatpush1.msra.mxu0 %v1908
          %1953 = vmatprep.subr.mxu0 0.0
          %1954 = vmatpush2.msra.mxu0 0.0
          %1955 = vmatprep.subr.mxu0 0.0
          %1956 = vmatpush2.msra.mxu0 0.0
          %1957 = vmatprep.subr.mxu0 0.0
          %1958 = vmatpush2.msra.mxu0 0.0
          %1959 = vmatprep.subr.mxu0 0.0
          %1960 = vmatpush2.msra.mxu0 0.0
          %1961 = vmatprep.subr.mxu0 0.0
          %1962 = vmatpush2.msra.mxu0 0.0
          %1963 = vmatprep.subr.mxu0 0.0
          %1964 = vmatpush2.msra.mxu0 0.0
          %1965 = vmatprep.subr.mxu0 0.0
          %1966 = vmatpush2.msra.mxu0 0.0
          %1967 = vmatprep.subr.mxu0 0.0
          %1968 = vmatpush2.msra.mxu0 0.0
          %1969 = vmatprep.subr.mxu0 0.0
          %1970 = vmatpush2.msra.mxu0 0.0
          %1971 = vmatprep.subr.mxu0 0.0
          %1972 = vmatpush2.msra.mxu0 0.0
          %1973 = vmatprep.subr.mxu0 0.0
          %1974 = vmatpush2.msra.mxu0 0.0
          %1975 = vmatprep.subr.mxu0 0.0
          %1976 = vmatpush2.msra.mxu0 0.0
          %1977 = vmatprep.subr.mxu0 0.0
          %1978 = vmatpush2.msra.mxu0 0.0
          %1979 = vmatprep.subr.mxu0 0.0
          %1980 = vmatpush2.msra.mxu0 0.0
          %1981 = vmatprep.subr.mxu0 0.0
          %1982 = vmatpush2.msra.mxu0 0.0
          %1983 = vmatprep.subr.mxu0 0.0
          %1984 = vmatpush2.msra.mxu0 0.0
          %1985 = vmatprep.mubr.f32.mxu0 0.0
          %1986 = vmatmul.mubr.f32.gmra.mxu0 %v1919
          %v1987 = vpop.f32.mrf.mxu0
          %v1988 = vadd.f32 0.0, %v1987
          %v1989 = vpop.f32.mrf.mxu0
          %1990 = vdwg.mxu0
          %v1991 = vadd.f32 %v1916, %v1988
          %vm1992 = vcmask 254976
          %1993 = vst.msk [vmem:[#allocation2] sm:$0x3] %vm1992, %v1991
        $region196: #{tpu_custom_call.1} parent=119 // pred_fallthru
          _
        %p1994 = pnand %p1592, %p1049
        %p1995 = pneg %p1994
        // Predicated region
        $region197: #{tpu_custom_call.1} parent=119 // pred_check
          _
        $region198: #{tpu_custom_call.1} parent=119 // pred_check_branch
          %1997 = sbr.rel (%p1994) target = $region200
        $region199: #{tpu_custom_call.1} parent=119 // pred_region
          %v1998 = vld [vmem:[#allocation2] sm:$0x3]
          %v1999 = vld [vmem:[#allocation22] sm:$0xff]
          %v2000 = vld [vmem:[#allocation22 + $0x8] sm:$0xff]
          %v2001 = vld [vmem:[#allocation22 + $0x10] sm:$0xff]
          %v2002 = vld [vmem:[#allocation22 + $0x18] sm:$0xff]
          %v2003 = vld [vmem:[%s18] sm:$0x1]
          %v2005 = vlaneseq
          %v2006 = vshrl.u32 %v2005, 7
          %v2007 = vsub.s32 0, %v2006
          %v2008 = vrot.slane %v2003, %v2007
          %vm2010 = vcmask 261120
          %v2012 = vsel %vm2010, %v1998, 0
          %2014 = vmatprep.subr.mxu0 0.0
          %2015 = vmatpush1.msra.mxu0 0.0
          %2016 = vmatprep.subr.mxu0 0.0
          %2017 = vmatpush1.msra.mxu0 0.0
          %2018 = vmatprep.subr.mxu0 0.0
          %2019 = vmatpush1.msra.mxu0 0.0
          %2020 = vmatprep.subr.mxu0 0.0
          %2021 = vmatpush1.msra.mxu0 0.0
          %2022 = vmatprep.subr.mxu0 0.0
          %2023 = vmatpush1.msra.mxu0 0.0
          %2024 = vmatprep.subr.mxu0 0.0
          %2025 = vmatpush1.msra.mxu0 0.0
          %2026 = vmatprep.subr.mxu0 0.0
          %2027 = vmatpush1.msra.mxu0 0.0
          %2028 = vmatprep.subr.mxu0 0.0
          %2029 = vmatpush1.msra.mxu0 0.0
          %2030 = vmatprep.subr.mxu0 0.0
          %2031 = vmatpush1.msra.mxu0 0.0
          %2032 = vmatprep.subr.mxu0 0.0
          %2033 = vmatpush1.msra.mxu0 0.0
          %2034 = vmatprep.subr.mxu0 0.0
          %2035 = vmatpush1.msra.mxu0 0.0
          %2036 = vmatprep.subr.mxu0 0.0
          %2037 = vmatpush1.msra.mxu0 0.0
          %2038 = vmatprep.subr.mxu0 0.0
          %2039 = vmatpush1.msra.mxu0 %v2002
          %2040 = vmatprep.subr.mxu0 0.0
          %2041 = vmatpush1.msra.mxu0 %v2001
          %2042 = vmatprep.subr.mxu0 0.0
          %2043 = vmatpush1.msra.mxu0 %v2000
          %2044 = vmatprep.subr.mxu0 0.0
          %2045 = vmatpush1.msra.mxu0 %v1999
          %2046 = vmatprep.subr.mxu0 0.0
          %2047 = vmatpush2.msra.mxu0 0.0
          %2048 = vmatprep.subr.mxu0 0.0
          %2049 = vmatpush2.msra.mxu0 0.0
          %2050 = vmatprep.subr.mxu0 0.0
          %2051 = vmatpush2.msra.mxu0 0.0
          %2052 = vmatprep.subr.mxu0 0.0
          %2053 = vmatpush2.msra.mxu0 0.0
          %2054 = vmatprep.subr.mxu0 0.0
          %2055 = vmatpush2.msra.mxu0 0.0
          %2056 = vmatprep.subr.mxu0 0.0
          %2057 = vmatpush2.msra.mxu0 0.0
          %2058 = vmatprep.subr.mxu0 0.0
          %2059 = vmatpush2.msra.mxu0 0.0
          %2060 = vmatprep.subr.mxu0 0.0
          %2061 = vmatpush2.msra.mxu0 0.0
          %2062 = vmatprep.subr.mxu0 0.0
          %2063 = vmatpush2.msra.mxu0 0.0
          %2064 = vmatprep.subr.mxu0 0.0
          %2065 = vmatpush2.msra.mxu0 0.0
          %2066 = vmatprep.subr.mxu0 0.0
          %2067 = vmatpush2.msra.mxu0 0.0
          %2068 = vmatprep.subr.mxu0 0.0
          %2069 = vmatpush2.msra.mxu0 0.0
          %2070 = vmatprep.subr.mxu0 0.0
          %2071 = vmatpush2.msra.mxu0 0.0
          %2072 = vmatprep.subr.mxu0 0.0
          %2073 = vmatpush2.msra.mxu0 0.0
          %2074 = vmatprep.subr.mxu0 0.0
          %2075 = vmatpush2.msra.mxu0 0.0
          %2076 = vmatprep.subr.mxu0 0.0
          %2077 = vmatpush2.msra.mxu0 0.0
          %2078 = vmatprep.mubr.f32.mxu0 0.0
          %2079 = vmatmul.mubr.f32.gmra.mxu0 %v2012
          %v2080 = vpop.f32.mrf.mxu0
          %v2081 = vadd.f32 %v2008, %v2080
          %v2082 = vpop.f32.mrf.mxu0
          %2083 = vdwg.mxu0
          %v2084 = vmax.f32 %v2081, 0.0
          %v2085 = vld [vmem:[#allocation24] sm:$0xff]
          %v2086 = vld [vmem:[#allocation24 + $0x8] sm:$0xff]
          %v2087 = vld [vmem:[#allocation24 + $0x10] sm:$0xff]
          %v2088 = vld [vmem:[#allocation24 + $0x18] sm:$0xff]
          %v2089 = vld [vmem:[%s20] sm:$0x1]
          %v2091 = vlaneseq
          %v2092 = vshrl.u32 %v2091, 7
          %v2093 = vsub.s32 0, %v2092
          %v2094 = vrot.slane %v2089, %v2093
          %v2097 = vsel %vm2010, %v2084, 0
          %2099 = vmatprep.subr.mxu0 0.0
          %2100 = vmatpush1.msra.mxu0 0.0
          %2101 = vmatprep.subr.mxu0 0.0
          %2102 = vmatpush1.msra.mxu0 0.0
          %2103 = vmatprep.subr.mxu0 0.0
          %2104 = vmatpush1.msra.mxu0 0.0
          %2105 = vmatprep.subr.mxu0 0.0
          %2106 = vmatpush1.msra.mxu0 0.0
          %2107 = vmatprep.subr.mxu0 0.0
          %2108 = vmatpush1.msra.mxu0 0.0
          %2109 = vmatprep.subr.mxu0 0.0
          %2110 = vmatpush1.msra.mxu0 0.0
          %2111 = vmatprep.subr.mxu0 0.0
          %2112 = vmatpush1.msra.mxu0 0.0
          %2113 = vmatprep.subr.mxu0 0.0
          %2114 = vmatpush1.msra.mxu0 0.0
          %2115 = vmatprep.subr.mxu0 0.0
          %2116 = vmatpush1.msra.mxu0 0.0
          %2117 = vmatprep.subr.mxu0 0.0
          %2118 = vmatpush1.msra.mxu0 0.0
          %2119 = vmatprep.subr.mxu0 0.0
          %2120 = vmatpush1.msra.mxu0 0.0
          %2121 = vmatprep.subr.mxu0 0.0
          %2122 = vmatpush1.msra.mxu0 0.0
          %2123 = vmatprep.subr.mxu0 0.0
          %2124 = vmatpush1.msra.mxu0 %v2088
          %2125 = vmatprep.subr.mxu0 0.0
          %2126 = vmatpush1.msra.mxu0 %v2087
          %2127 = vmatprep.subr.mxu0 0.0
          %2128 = vmatpush1.msra.mxu0 %v2086
          %2129 = vmatprep.subr.mxu0 0.0
          %2130 = vmatpush1.msra.mxu0 %v2085
          %2131 = vmatprep.subr.mxu0 0.0
          %2132 = vmatpush2.msra.mxu0 0.0
          %2133 = vmatprep.subr.mxu0 0.0
          %2134 = vmatpush2.msra.mxu0 0.0
          %2135 = vmatprep.subr.mxu0 0.0
          %2136 = vmatpush2.msra.mxu0 0.0
          %2137 = vmatprep.subr.mxu0 0.0
          %2138 = vmatpush2.msra.mxu0 0.0
          %2139 = vmatprep.subr.mxu0 0.0
          %2140 = vmatpush2.msra.mxu0 0.0
          %2141 = vmatprep.subr.mxu0 0.0
          %2142 = vmatpush2.msra.mxu0 0.0
          %2143 = vmatprep.subr.mxu0 0.0
          %2144 = vmatpush2.msra.mxu0 0.0
          %2145 = vmatprep.subr.mxu0 0.0
          %2146 = vmatpush2.msra.mxu0 0.0
          %2147 = vmatprep.subr.mxu0 0.0
          %2148 = vmatpush2.msra.mxu0 0.0
          %2149 = vmatprep.subr.mxu0 0.0
          %2150 = vmatpush2.msra.mxu0 0.0
          %2151 = vmatprep.subr.mxu0 0.0
          %2152 = vmatpush2.msra.mxu0 0.0
          %2153 = vmatprep.subr.mxu0 0.0
          %2154 = vmatpush2.msra.mxu0 0.0
          %2155 = vmatprep.subr.mxu0 0.0
          %2156 = vmatpush2.msra.mxu0 0.0
          %2157 = vmatprep.subr.mxu0 0.0
          %2158 = vmatpush2.msra.mxu0 0.0
          %2159 = vmatprep.subr.mxu0 0.0
          %2160 = vmatpush2.msra.mxu0 0.0
          %2161 = vmatprep.subr.mxu0 0.0
          %2162 = vmatpush2.msra.mxu0 0.0
          %2163 = vmatprep.mubr.f32.mxu0 0.0
          %2164 = vmatmul.mubr.f32.gmra.mxu0 %v2097
          %v2165 = vpop.f32.mrf.mxu0
          %v2166 = vadd.f32 %v2094, %v2165
          %v2167 = vpop.f32.mrf.mxu0
          %2168 = vdwg.mxu0
          %v2169 = vld [vmem:[#allocation25] sm:$0xff]
          %v2170 = vld [vmem:[#allocation25 + $0x8] sm:$0xff]
          %v2171 = vld [vmem:[#allocation25 + $0x10] sm:$0xff]
          %v2172 = vld [vmem:[#allocation25 + $0x18] sm:$0xff]
          %v2173 = vld [vmem:[%s22] sm:$0x1]
          %v2175 = vlaneseq
          %v2176 = vshrl.u32 %v2175, 7
          %v2177 = vsub.s32 0, %v2176
          %v2178 = vrot.slane %v2173, %v2177
          %v2181 = vsel %vm2010, %v2166, 0
          %2183 = vmatprep.subr.mxu0 0.0
          %2184 = vmatpush1.msra.mxu0 0.0
          %2185 = vmatprep.subr.mxu0 0.0
          %2186 = vmatpush1.msra.mxu0 0.0
          %2187 = vmatprep.subr.mxu0 0.0
          %2188 = vmatpush1.msra.mxu0 0.0
          %2189 = vmatprep.subr.mxu0 0.0
          %2190 = vmatpush1.msra.mxu0 0.0
          %2191 = vmatprep.subr.mxu0 0.0
          %2192 = vmatpush1.msra.mxu0 0.0
          %2193 = vmatprep.subr.mxu0 0.0
          %2194 = vmatpush1.msra.mxu0 0.0
          %2195 = vmatprep.subr.mxu0 0.0
          %2196 = vmatpush1.msra.mxu0 0.0
          %2197 = vmatprep.subr.mxu0 0.0
          %2198 = vmatpush1.msra.mxu0 0.0
          %2199 = vmatprep.subr.mxu0 0.0
          %2200 = vmatpush1.msra.mxu0 0.0
          %2201 = vmatprep.subr.mxu0 0.0
          %2202 = vmatpush1.msra.mxu0 0.0
          %2203 = vmatprep.subr.mxu0 0.0
          %2204 = vmatpush1.msra.mxu0 0.0
          %2205 = vmatprep.subr.mxu0 0.0
          %2206 = vmatpush1.msra.mxu0 0.0
          %2207 = vmatprep.subr.mxu0 0.0
          %2208 = vmatpush1.msra.mxu0 %v2172
          %2209 = vmatprep.subr.mxu0 0.0
          %2210 = vmatpush1.msra.mxu0 %v2171
          %2211 = vmatprep.subr.mxu0 0.0
          %2212 = vmatpush1.msra.mxu0 %v2170
          %2213 = vmatprep.subr.mxu0 0.0
          %2214 = vmatpush1.msra.mxu0 %v2169
          %2215 = vmatprep.subr.mxu0 0.0
          %2216 = vmatpush2.msra.mxu0 0.0
          %2217 = vmatprep.subr.mxu0 0.0
          %2218 = vmatpush2.msra.mxu0 0.0
          %2219 = vmatprep.subr.mxu0 0.0
          %2220 = vmatpush2.msra.mxu0 0.0
          %2221 = vmatprep.subr.mxu0 0.0
          %2222 = vmatpush2.msra.mxu0 0.0
          %2223 = vmatprep.subr.mxu0 0.0
          %2224 = vmatpush2.msra.mxu0 0.0
          %2225 = vmatprep.subr.mxu0 0.0
          %2226 = vmatpush2.msra.mxu0 0.0
          %2227 = vmatprep.subr.mxu0 0.0
          %2228 = vmatpush2.msra.mxu0 0.0
          %2229 = vmatprep.subr.mxu0 0.0
          %2230 = vmatpush2.msra.mxu0 0.0
          %2231 = vmatprep.subr.mxu0 0.0
          %2232 = vmatpush2.msra.mxu0 0.0
          %2233 = vmatprep.subr.mxu0 0.0
          %2234 = vmatpush2.msra.mxu0 0.0
          %2235 = vmatprep.subr.mxu0 0.0
          %2236 = vmatpush2.msra.mxu0 0.0
          %2237 = vmatprep.subr.mxu0 0.0
          %2238 = vmatpush2.msra.mxu0 0.0
          %2239 = vmatprep.subr.mxu0 0.0
          %2240 = vmatpush2.msra.mxu0 0.0
          %2241 = vmatprep.subr.mxu0 0.0
          %2242 = vmatpush2.msra.mxu0 0.0
          %2243 = vmatprep.subr.mxu0 0.0
          %2244 = vmatpush2.msra.mxu0 0.0
          %2245 = vmatprep.subr.mxu0 0.0
          %2246 = vmatpush2.msra.mxu0 0.0
          %2247 = vmatprep.mubr.f32.mxu0 0.0
          %2248 = vmatmul.mubr.f32.gmra.mxu0 %v2181
          %v2249 = vpop.f32.mrf.mxu0
          %v2250 = vadd.f32 %v2178, %v2249
          %v2251 = vpop.f32.mrf.mxu0
          %2252 = vdwg.mxu0
          %v2253 = vmax.f32 %v2250, 0.0
          %v2254 = vld [vmem:[#allocation27] sm:$0xff]
          %v2255 = vld [vmem:[#allocation27 + $0x8] sm:$0xff]
          %v2256 = vld [vmem:[#allocation27 + $0x10] sm:$0xff]
          %v2257 = vld [vmem:[#allocation27 + $0x18] sm:$0xff]
          %v2258 = vld [vmem:[%s24] sm:$0x1]
          %v2260 = vlaneseq
          %v2261 = vshrl.u32 %v2260, 7
          %v2262 = vsub.s32 0, %v2261
          %v2263 = vrot.slane %v2258, %v2262
          %v2266 = vsel %vm2010, %v2253, 0
          %2268 = vmatprep.subr.mxu0 0.0
          %2269 = vmatpush1.msra.mxu0 0.0
          %2270 = vmatprep.subr.mxu0 0.0
          %2271 = vmatpush1.msra.mxu0 0.0
          %2272 = vmatprep.subr.mxu0 0.0
          %2273 = vmatpush1.msra.mxu0 0.0
          %2274 = vmatprep.subr.mxu0 0.0
          %2275 = vmatpush1.msra.mxu0 0.0
          %2276 = vmatprep.subr.mxu0 0.0
          %2277 = vmatpush1.msra.mxu0 0.0
          %2278 = vmatprep.subr.mxu0 0.0
          %2279 = vmatpush1.msra.mxu0 0.0
          %2280 = vmatprep.subr.mxu0 0.0
          %2281 = vmatpush1.msra.mxu0 0.0
          %2282 = vmatprep.subr.mxu0 0.0
          %2283 = vmatpush1.msra.mxu0 0.0
          %2284 = vmatprep.subr.mxu0 0.0
          %2285 = vmatpush1.msra.mxu0 0.0
          %2286 = vmatprep.subr.mxu0 0.0
          %2287 = vmatpush1.msra.mxu0 0.0
          %2288 = vmatprep.subr.mxu0 0.0
          %2289 = vmatpush1.msra.mxu0 0.0
          %2290 = vmatprep.subr.mxu0 0.0
          %2291 = vmatpush1.msra.mxu0 0.0
          %2292 = vmatprep.subr.mxu0 0.0
          %2293 = vmatpush1.msra.mxu0 %v2257
          %2294 = vmatprep.subr.mxu0 0.0
          %2295 = vmatpush1.msra.mxu0 %v2256
          %2296 = vmatprep.subr.mxu0 0.0
          %2297 = vmatpush1.msra.mxu0 %v2255
          %2298 = vmatprep.subr.mxu0 0.0
          %2299 = vmatpush1.msra.mxu0 %v2254
          %2300 = vmatprep.subr.mxu0 0.0
          %2301 = vmatpush2.msra.mxu0 0.0
          %2302 = vmatprep.subr.mxu0 0.0
          %2303 = vmatpush2.msra.mxu0 0.0
          %2304 = vmatprep.subr.mxu0 0.0
          %2305 = vmatpush2.msra.mxu0 0.0
          %2306 = vmatprep.subr.mxu0 0.0
          %2307 = vmatpush2.msra.mxu0 0.0
          %2308 = vmatprep.subr.mxu0 0.0
          %2309 = vmatpush2.msra.mxu0 0.0
          %2310 = vmatprep.subr.mxu0 0.0
          %2311 = vmatpush2.msra.mxu0 0.0
          %2312 = vmatprep.subr.mxu0 0.0
          %2313 = vmatpush2.msra.mxu0 0.0
          %2314 = vmatprep.subr.mxu0 0.0
          %2315 = vmatpush2.msra.mxu0 0.0
          %2316 = vmatprep.subr.mxu0 0.0
          %2317 = vmatpush2.msra.mxu0 0.0
          %2318 = vmatprep.subr.mxu0 0.0
          %2319 = vmatpush2.msra.mxu0 0.0
          %2320 = vmatprep.subr.mxu0 0.0
          %2321 = vmatpush2.msra.mxu0 0.0
          %2322 = vmatprep.subr.mxu0 0.0
          %2323 = vmatpush2.msra.mxu0 0.0
          %2324 = vmatprep.subr.mxu0 0.0
          %2325 = vmatpush2.msra.mxu0 0.0
          %2326 = vmatprep.subr.mxu0 0.0
          %2327 = vmatpush2.msra.mxu0 0.0
          %2328 = vmatprep.subr.mxu0 0.0
          %2329 = vmatpush2.msra.mxu0 0.0
          %2330 = vmatprep.subr.mxu0 0.0
          %2331 = vmatpush2.msra.mxu0 0.0
          %2332 = vmatprep.mubr.f32.mxu0 0.0
          %2333 = vmatmul.mubr.f32.gmra.mxu0 %v2266
          %v2334 = vpop.f32.mrf.mxu0
          %v2335 = vadd.f32 %v2263, %v2334
          %v2336 = vpop.f32.mrf.mxu0
          %2337 = vdwg.mxu0
          %2338 = vst [vmem:[#allocation28] sm:$0x3] %v2335
        $region200: #{tpu_custom_call.1} parent=119 // pred_fallthru
          _
        // Predicated region
        $region201: #{tpu_custom_call.1} parent=119 // pred_check
          %p2339 = pneg %p625
        $region202: #{tpu_custom_call.1} parent=119 // pred_check_branch
          %2341 = sbr.rel (%p2339) target = $region204
        $region203: #{tpu_custom_call.1} parent=119 // pred_region
          %s2343 = ssub.s32 32, 32
          %2344 = vsyncadd [#allocation6], %s2343
          %s2346 = sshll.u32 [#allocation28], 4
          %s2347 = int_to_ptr.vmem [resolvable:$true] %s2346
          %2349 = dma.vmem_to_hbm [thread:$0]  %s2347, 32, %s25, [#allocation6]
        $region204: #{tpu_custom_call.1} parent=119 // pred_fallthru
          _
        // Predicated region
        $region205: #{tpu_custom_call.1} parent=119 // pred_check
          %p2350 = pneg %p625
        $region206: #{tpu_custom_call.1} parent=119 // pred_check_branch
          %2352 = sbr.rel (%p2350) target = $region208
        $region207: #{tpu_custom_call.1} parent=119 // pred_region
          %2353 = dma.done [#allocation6], 32
        $region208: #{tpu_custom_call.1} parent=119 // pred_fallthru
          _
      $region120: #{tpu_custom_call.1} parent=5 // pred_fallthru
        _
      %p2354 = scmp.le.s32.totalorder 2, %s42
      // Predicated region
      $region209: #{tpu_custom_call.1} parent=5 // pred_check
        %p2355 = pneg %p2354
      $region210: #{tpu_custom_call.1} parent=5 // pred_check_branch
        %2357 = sbr.rel (%p2355) target = $region212
      $region211: #{tpu_custom_call.1} parent=5 // pred_region
        %s2358 = ssub.s32 %s42, 2
      $region212: #{tpu_custom_call.1} parent=5 // pred_fallthru
        _
    $region6: #{tpu_custom_call.1} parent=1 // loop_footer
      %s46 = sadd.s32 1, %s42
    $region7: #{tpu_custom_call.1} parent=1 // loop_footer_branch
      %41 = sbr.rel target = $region3
    $region8: #{tpu_custom_call.1} parent=1 // loop_exit
      _
    %2359 = vsyncpa [#allocation5], 1
    %s2360 = scalar_lea.sflag [#allocation5], 1
    %2361 = vsyncpa %s2360, 1
    %2362 = vsyncpa [#allocation8], 1
    %2363 = vsyncpa [#allocation11], 1
    %2364 = vsyncpa [#allocation14], 1
    %2365 = vsyncpa [#allocation17], 1
    %2366 = vsyncpa [#allocation20], 1
    %2367 = vsyncpa [#allocation23], 1
    %2368 = vsyncpa [#allocation26], 1
    %2369 = vsyncpa [#allocation6], 1
    %s2370 = scalar_lea.sflag [#allocation6], 1
    %2371 = vsyncpa %s2370, 1

</llo_original>
